<compile_context>
chip_gen: v6e
topology: v6e:2x2x1
jax: 0.10.0
libtpu: 0.0.40
codegen_flags: <defaults>
</compile_context>

<pallas_src>
import math
import functools

import jax
import jax.numpy as jnp
from jax.experimental import pallas as pl
from jax.experimental.pallas import tpu as pltpu

_EPS = 1e-5          # nn.BatchNorm1d default eps
_LANES = 128


def _round_up(n, m):
    return ((n + m - 1) // m) * m


# ----------------------------- in-kernel helpers ---------------------------

def _bn_relu(x, gamma, beta, axes):
    """Training-mode batch norm (biased variance, E[x^2]-mean^2) + ReLU."""
    mean = jnp.mean(x, axis=axes, keepdims=True)
    mean_sq = jnp.mean(x * x, axis=axes, keepdims=True)
    var = mean_sq - mean * mean
    y = gamma * (x - mean) * jax.lax.rsqrt(var + _EPS) + beta
    return jnp.maximum(y, 0.0)


def _avgpool_l(x, p):
    """AvgPool1d(kernel=p, stride=p) over the L axis of (B, L, C)."""
    if p == 1:                      # static -> the else branch is never traced
        return x
    bsz, length, ch = x.shape
    l_out = length // p
    return jnp.mean(x[:, : l_out * p, :].reshape(bsz, l_out, p, ch), axis=2)


# --------------------------------- kernel ----------------------------------

def _cnn1d_bn_kernel(x_ref, wm_ref, vec_ref, o_ref, *,
                     ksize, pool_size, vec_rows, mat_rows):
    def vrow(name):                 # (1, width) parameter-vector row
        r, w = vec_rows[name]
        return vec_ref[r:r + 1, 0:w]

    def wmat(name):                 # (rows, cols) packed weight matrix
        r0, nr, nc = mat_rows[name]
        return wm_ref[r0:r0 + nr, 0:nc]

    x = x_ref[...]                                      # (B, L0, 1)
    l1 = x.shape[1] - ksize + 1

    # ---- conv1 (Cin=1): pure VPU broadcast FMA, no MXU ---------------------
    h = x[:, 0:l1, :] * vrow("conv1_w0") + vrow("conv1_b")   # (B, l1, 16)
    for k in range(1, ksize):
        h = h + x[:, k:k + l1, :] * vrow(f"conv1_w{k}")
    h = _bn_relu(h, vrow("bn1_g"), vrow("bn1_b"), axes=(0, 1))
    h = _avgpool_l(h, pool_size)

    # ---- conv2..4: fold the K taps into one contraction per layer ----------
    for i in (2, 3, 4):
        l_out = h.shape[1] - ksize + 1
        x_cat = jnp.concatenate(
            [h[:, k:k + l_out, :] for k in range(ksize)], axis=-1)  # (B,l,K*Cin)
        h = jnp.einsum("blc,co->blo", x_cat, wmat(f"conv{i}_w"),
                       preferred_element_type=jnp.float32) + vrow(f"conv{i}_b")
        h = _bn_relu(h, vrow(f"bn{i}_g"), vrow(f"bn{i}_b"), axes=(0, 1))
        h = _avgpool_l(h, pool_size)

    # ---- fc1: channel-major flatten via lane concat + one deep-K matmul ----
    z_in = jnp.concatenate([h[:, l, :] for l in range(h.shape[1])], axis=-1)
    z = jnp.dot(z_in, wmat("fc1_w"),
                preferred_element_type=jnp.float32) + vrow("fc1_b")
    z = _bn_relu(z, vrow("bn5_g"), vrow("bn5_b"), axes=(0,))

    # ---- fc2 (output padded to 128 lanes -> lane-dense store) --------------
    out = jnp.dot(z, wmat("fc2_w"),
                  preferred_element_type=jnp.float32) + vrow("fc2_b")
    o_ref[...] = out.astype(o_ref.dtype)


# --------------------------- parameter packing ------------------------------

def _pack_params(params, *, kernel_size, n_classes):
    f32 = jnp.float32

    # Vector buffer: one parameter vector per 128-lane row (zero padded).
    vec_rows = {}
    rows = []

    def add_row(name, v, width=None):
        v = jnp.asarray(v, f32).reshape(-1)
        vec_rows[name] = (len(rows), int(width if width is not None else v.size))
        rows.append(jnp.pad(v, (0, _LANES - v.shape[0])))

    w1 = jnp.asarray(params["conv1_w"], f32)            # (16, 1, K)
    for k in range(kernel_size):
        add_row(f"conv1_w{k}", w1[:, 0, k])
    add_row("conv1_b", params["conv1_b"])
    add_row("bn1_g", params["bn1_g"])
    add_row("bn1_b", params["bn1_b"])
    for i in (2, 3, 4):
        add_row(f"conv{i}_b", params[f"conv{i}_b"])
        add_row(f"bn{i}_g", params[f"bn{i}_g"])
        add_row(f"bn{i}_b", params[f"bn{i}_b"])
    add_row("fc1_b", params["fc1_b"])
    add_row("bn5_g", params["bn5_g"])
    add_row("bn5_b", params["bn5_b"])
    add_row("fc2_b", params["fc2_b"], width=_LANES)     # lane-dense fc2 output
    while len(rows) % 8:
        rows.append(jnp.zeros((_LANES,), f32))
    vec = jnp.stack(rows, axis=0)                       # (24, 128)

    # Matrix buffer: all 2-D matmul weights stacked along sublanes.
    mat_rows = {}
    blocks = []
    off = 0

    def add_mat(name, m, full_cols=False):
        nonlocal off
        m = jnp.asarray(m, f32)
        nr, nc = m.shape
        nr_pad = _round_up(nr, 8)
        blocks.append(jnp.zeros((nr_pad, _LANES), f32).at[:nr, :nc].set(m))
        mat_rows[name] = (off, nr, _LANES if full_cols else nc)
        off += nr_pad

    # conv{i}.weight (Cout, Cin, K) -> (K*Cin, Cout), row index = k*Cin + c
    for i, cin, cout in ((2, 16, 32), (3, 32, 64), (4, 64, 128)):
        w = jnp.asarray(params[f"conv{i}_w"], f32)
        w = jnp.transpose(w, (2, 1, 0)).reshape(kernel_size * cin, cout)
        add_mat(f"conv{i}_w", w)

    # fc1.weight (128, 128*L) indexed [o, c*L + l] -> rows indexed l*128 + c
    fc1_w = jnp.asarray(params["fc1_w"], f32)
    l_fc = fc1_w.shape[1] // 128
    wf1 = fc1_w.reshape(128, 128, l_fc).transpose(2, 1, 0).reshape(l_fc * 128, 128)
    add_mat("fc1_w", wf1)

    # fc2.weight (n_classes, 128) -> (128, n_classes), zero-padded to 128 cols
    wf2 = jnp.transpose(jnp.asarray(params["fc2_w"], f32), (1, 0))
    add_mat("fc2_w", wf2, full_cols=True)

    wmat = jnp.concatenate(blocks, axis=0)              # (1248, 128)
    return wmat, vec, mat_rows, vec_rows


# -------------------------------- wrapper -----------------------------------

def cnn1d_batchnorm_forward(x, params, *, kernel_size, pool_size, n_classes):
    """x: (B, input_channels, 1, 1) float32 (PyTorch NCHW-style input)."""
    bsz = x.shape[0]
    # x.squeeze(-1).squeeze(-1).unsqueeze(1) in NCL == (B, L, 1) in our layout.
    x_nlc = x.reshape(bsz, -1)[:, :, None].astype(jnp.float32)

    wmat, vec, mat_rows, vec_rows = _pack_params(
        params, kernel_size=kernel_size, n_classes=n_classes)

    vmem = pl.BlockSpec(memory_space=pltpu.MemorySpace.VMEM)
    out_pad = pl.pallas_call(
        functools.partial(_cnn1d_bn_kernel,
                          ksize=kernel_size, pool_size=pool_size,
                          vec_rows=vec_rows, mat_rows=mat_rows),
        out_shape=jax.ShapeDtypeStruct((bsz, _LANES), jnp.float32),
        in_specs=[vmem, vmem, vmem],
        out_specs=vmem,
    )(x_nlc, wmat, vec)
    return out_pad[:, :n_classes]


# ------------------------- plain-JAX reference (NCL) ------------------------

def reference_forward(x, params, *, pool_size):
    bsz = x.shape[0]
    h = x.reshape(bsz, -1)[:, None, :]  # (B, 1, L)  NCL, like PyTorch

    def conv(h, w, b):
        K = w.shape[2]
        l_out = h.shape[2] - K + 1
        out = jnp.zeros((bsz, w.shape[0], l_out), jnp.float32)
        for k in range(K):
            out = out + jnp.einsum("bcl,oc->bol", h[:, :, k:k + l_out], w[:, :, k])
        return out + b[None, :, None]

    def bn(h, g, be, axes):
        m = jnp.mean(h, axis=axes, keepdims=True)
        v = jnp.mean(jnp.square(h - m), axis=axes, keepdims=True)
        return g * (h - m) / jnp.sqrt(v + _EPS) + be

    def pool(h, p):
        if p == 1:
            return h
        b_, c_, l_ = h.shape
        lo = l_ // p
        return jnp.mean(h[:, :, : lo * p].reshape(b_, c_, lo, p), axis=3)

    for i in (1, 2, 3, 4):
        h = conv(h, params[f"conv{i}_w"], params[f"conv{i}_b"])
        h = jnp.maximum(
            bn(h, params[f"bn{i}_g"].reshape(1, -1, 1),
               params[f"bn{i}_b"].reshape(1, -1, 1), axes=(0, 2)), 0.0)
        h = pool(h, pool_size)

    z = h.reshape(bsz, -1) @ params["fc1_w"].T + params["fc1_b"]
    z = jnp.maximum(
        bn(z, params["bn5_g"][None, :], params["bn5_b"][None, :], axes=(0,)), 0.0)
    return z @ params["fc2_w"].T + params["fc2_b"]


# ---------------------------------- main -------------------------------------

if __name__ == "__main__":
    input_channels = 11
    n_classes = 10
    kernel_size = math.ceil(input_channels / 9)   # 2
    pool_size = math.ceil(kernel_size / 5)        # 1
    batch = 2

    key = jax.random.PRNGKey(0)
    ks = jax.random.split(key, 8)

    def uni(k, shape):
        return jax.random.uniform(k, shape, jnp.float32, -0.05, 0.05)

    params = {
        "conv1_w": uni(ks[0], (16, 1, kernel_size)),   "conv1_b": jnp.zeros((16,), jnp.float32),
        "conv2_w": uni(ks[1], (32, 16, kernel_size)),  "conv2_b": jnp.zeros((32,), jnp.float32),
        "conv3_w": uni(ks[2], (64, 32, kernel_size)),  "conv3_b": jnp.zeros((64,), jnp.float32),
        "conv4_w": uni(ks[3], (128, 64, kernel_size)), "conv4_b": jnp.zeros((128,), jnp.float32),
        "bn1_g": jnp.ones((16,), jnp.float32),  "bn1_b": jnp.zeros((16,), jnp.float32),
        "bn2_g": jnp.ones((32,), jnp.float32),  "bn2_b": jnp.zeros((32,), jnp.float32),
        "bn3_g": jnp.ones((64,), jnp.float32),  "bn3_b": jnp.zeros((64,), jnp.float32),
        "bn4_g": jnp.ones((128,), jnp.float32), "bn4_b": jnp.zeros((128,), jnp.float32),
        "fc1_w": uni(ks[4], (128, 128 * 7)),    "fc1_b": jnp.zeros((128,), jnp.float32),
        "bn5_g": jnp.ones((128,), jnp.float32), "bn5_b": jnp.zeros((128,), jnp.float32),
        "fc2_w": uni(ks[5], (n_classes, 128)),  "fc2_b": jnp.zeros((n_classes,), jnp.float32),
    }

    x = jax.random.normal(ks[6], (batch, input_channels, 1, 1), jnp.float32)

    fwd = jax.jit(functools.partial(
        cnn1d_batchnorm_forward, kernel_size=kernel_size,
        pool_size=pool_size, n_classes=n_classes))
    out = jax.block_until_ready(fwd(x, params))

    ref = reference_forward(x, params, pool_size=pool_size)
    assert out.shape == (batch, n_classes), out.shape
    assert jnp.allclose(out, ref, rtol=1e-3, atol=1e-3), (out, ref)

    print("KERNEL_OK")
</pallas_src>

<mosaic_0001>
module attributes {stable_mosaic.version = 11 : i64} {
  func.func @_cnn1d_bn_kernel(%arg0: memref<2x11x1xf32, #tpu.memory_space<vmem>>, %arg1: memref<1248x128xf32, #tpu.memory_space<vmem>>, %arg2: memref<24x128xf32, #tpu.memory_space<vmem>>, %arg3: memref<2x128xf32, #tpu.memory_space<vmem>>) attributes {dimension_semantics = [], scalar_prefetch = 0 : i64, scratch_operands = 0 : i64, tpu.core_type = #tpu.core_type<tc>} {
    %c0 = arith.constant 0 : index
    %c0_0 = arith.constant 0 : index
    %c0_1 = arith.constant 0 : index
    %0 = vector.load %arg0[%c0, %c0_0, %c0_1] : memref<2x11x1xf32, #tpu.memory_space<vmem>>, vector<2x11x1xf32>
    %1 = vector.extract_strided_slice %0 {offsets = [0, 0, 0], sizes = [2, 10, 1], strides = [1, 1, 1]} : vector<2x11x1xf32> to vector<2x10x1xf32>
    %c0_2 = arith.constant 0 : index
    %c0_3 = arith.constant 0 : index
    %2 = vector.load %arg2[%c0_2, %c0_3] : memref<24x128xf32, #tpu.memory_space<vmem>>, vector<1x16xf32>
    %3 = vector.shape_cast %2 : vector<1x16xf32> to vector<1x1x16xf32>
    %4 = vector.broadcast %1 : vector<2x10x1xf32> to vector<2x10x16xf32>
    %5 = vector.broadcast %3 : vector<1x1x16xf32> to vector<2x10x16xf32>
    %6 = arith.mulf %4, %5 : vector<2x10x16xf32>
    %c2 = arith.constant 2 : index
    %c0_4 = arith.constant 0 : index
    %7 = vector.load %arg2[%c2, %c0_4] : memref<24x128xf32, #tpu.memory_space<vmem>>, vector<1x16xf32>
    %8 = vector.shape_cast %7 : vector<1x16xf32> to vector<1x1x16xf32>
    %9 = vector.broadcast %8 : vector<1x1x16xf32> to vector<2x10x16xf32>
    %10 = arith.addf %6, %9 : vector<2x10x16xf32>
    %11 = vector.extract_strided_slice %0 {offsets = [0, 1, 0], sizes = [2, 10, 1], strides = [1, 1, 1]} : vector<2x11x1xf32> to vector<2x10x1xf32>
    %c1 = arith.constant 1 : index
    %c0_5 = arith.constant 0 : index
    %12 = vector.load %arg2[%c1, %c0_5] : memref<24x128xf32, #tpu.memory_space<vmem>>, vector<1x16xf32>
    %13 = vector.shape_cast %12 : vector<1x16xf32> to vector<1x1x16xf32>
    %14 = vector.broadcast %11 : vector<2x10x1xf32> to vector<2x10x16xf32>
    %15 = vector.broadcast %13 : vector<1x1x16xf32> to vector<2x10x16xf32>
    %16 = arith.mulf %14, %15 : vector<2x10x16xf32>
    %17 = arith.addf %10, %16 : vector<2x10x16xf32>
    %c3 = arith.constant 3 : index
    %c0_6 = arith.constant 0 : index
    %18 = vector.load %arg2[%c3, %c0_6] : memref<24x128xf32, #tpu.memory_space<vmem>>, vector<1x16xf32>
    %c4 = arith.constant 4 : index
    %c0_7 = arith.constant 0 : index
    %19 = vector.load %arg2[%c4, %c0_7] : memref<24x128xf32, #tpu.memory_space<vmem>>, vector<1x16xf32>
    %cst = arith.constant dense<0.000000e+00> : vector<16xf32>
    %20 = vector.multi_reduction <add>, %17, %cst [0, 1] : vector<2x10x16xf32> to vector<16xf32>
    %21 = vector.shape_cast %20 : vector<16xf32> to vector<1x1x16xf32>
    %cst_8 = arith.constant 2.000000e+01 : f32
    %22 = vector.broadcast %cst_8 : f32 to vector<1x1x16xf32>
    %23 = arith.divf %21, %22 : vector<1x1x16xf32>
    %24 = arith.mulf %17, %17 : vector<2x10x16xf32>
    %cst_9 = arith.constant dense<0.000000e+00> : vector<16xf32>
    %25 = vector.multi_reduction <add>, %24, %cst_9 [0, 1] : vector<2x10x16xf32> to vector<16xf32>
    %26 = vector.shape_cast %25 : vector<16xf32> to vector<1x1x16xf32>
    %cst_10 = arith.constant 2.000000e+01 : f32
    %27 = vector.broadcast %cst_10 : f32 to vector<1x1x16xf32>
    %28 = arith.divf %26, %27 : vector<1x1x16xf32>
    %29 = arith.mulf %23, %23 : vector<1x1x16xf32>
    %30 = arith.subf %28, %29 : vector<1x1x16xf32>
    %31 = vector.broadcast %23 : vector<1x1x16xf32> to vector<2x10x16xf32>
    %32 = arith.subf %17, %31 : vector<2x10x16xf32>
    %33 = vector.shape_cast %18 : vector<1x16xf32> to vector<1x1x16xf32>
    %34 = vector.broadcast %33 : vector<1x1x16xf32> to vector<2x10x16xf32>
    %35 = arith.mulf %34, %32 : vector<2x10x16xf32>
    %cst_11 = arith.constant 9.99999974E-6 : f32
    %36 = vector.broadcast %cst_11 : f32 to vector<1x1x16xf32>
    %37 = arith.addf %30, %36 : vector<1x1x16xf32>
    %38 = math.rsqrt %37 : vector<1x1x16xf32>
    %39 = vector.broadcast %38 : vector<1x1x16xf32> to vector<2x10x16xf32>
    %40 = arith.mulf %35, %39 : vector<2x10x16xf32>
    %41 = vector.shape_cast %19 : vector<1x16xf32> to vector<1x1x16xf32>
    %42 = vector.broadcast %41 : vector<1x1x16xf32> to vector<2x10x16xf32>
    %43 = arith.addf %40, %42 : vector<2x10x16xf32>
    %cst_12 = arith.constant 0.000000e+00 : f32
    %44 = vector.broadcast %cst_12 : f32 to vector<2x10x16xf32>
    %45 = arith.maximumf %43, %44 : vector<2x10x16xf32>
    %46 = vector.extract_strided_slice %45 {offsets = [0, 0, 0], sizes = [2, 9, 16], strides = [1, 1, 1]} : vector<2x10x16xf32> to vector<2x9x16xf32>
    %47 = vector.extract_strided_slice %45 {offsets = [0, 1, 0], sizes = [2, 9, 16], strides = [1, 1, 1]} : vector<2x10x16xf32> to vector<2x9x16xf32>
    %48 = tpu.concatenate %46, %47 in 2 : vector<2x9x16xf32>, vector<2x9x16xf32> -> vector<2x9x32xf32>
    %c0_13 = arith.constant 0 : index
    %c0_14 = arith.constant 0 : index
    %49 = vector.load %arg1[%c0_13, %c0_14] : memref<1248x128xf32, #tpu.memory_space<vmem>>, vector<32x32xf32>
    "tpu.trace_start"() <{level = 10 : i32, message = "blc,co->blo"}> : () -> ()
    %cst_15 = arith.constant dense<0.000000e+00> : vector<2x9x32xf32>
    %50 = tpu.matmul %48, %49, %cst_15 {dimension_numbers = #tpu.dot_dimension_numbers<[2], [0], [0, 1], [1], [0, 0, 0, 1, 1, 1], [], []>} : vector<2x9x32xf32>, vector<32x32xf32>, vector<2x9x32xf32> -> vector<2x9x32xf32>
    "tpu.trace_stop"() : () -> ()
    %c5 = arith.constant 5 : index
    %c0_16 = arith.constant 0 : index
    %51 = vector.load %arg2[%c5, %c0_16] : memref<24x128xf32, #tpu.memory_space<vmem>>, vector<1x32xf32>
    %52 = vector.shape_cast %51 : vector<1x32xf32> to vector<1x1x32xf32>
    %53 = vector.broadcast %52 : vector<1x1x32xf32> to vector<2x9x32xf32>
    %54 = arith.addf %50, %53 : vector<2x9x32xf32>
    %c6 = arith.constant 6 : index
    %c0_17 = arith.constant 0 : index
    %55 = vector.load %arg2[%c6, %c0_17] : memref<24x128xf32, #tpu.memory_space<vmem>>, vector<1x32xf32>
    %c7 = arith.constant 7 : index
    %c0_18 = arith.constant 0 : index
    %56 = vector.load %arg2[%c7, %c0_18] : memref<24x128xf32, #tpu.memory_space<vmem>>, vector<1x32xf32>
    %cst_19 = arith.constant dense<0.000000e+00> : vector<32xf32>
    %57 = vector.multi_reduction <add>, %54, %cst_19 [0, 1] : vector<2x9x32xf32> to vector<32xf32>
    %58 = vector.shape_cast %57 : vector<32xf32> to vector<1x1x32xf32>
    %cst_20 = arith.constant 1.800000e+01 : f32
    %59 = vector.broadcast %cst_20 : f32 to vector<1x1x32xf32>
    %60 = arith.divf %58, %59 : vector<1x1x32xf32>
    %61 = arith.mulf %54, %54 : vector<2x9x32xf32>
    %cst_21 = arith.constant dense<0.000000e+00> : vector<32xf32>
    %62 = vector.multi_reduction <add>, %61, %cst_21 [0, 1] : vector<2x9x32xf32> to vector<32xf32>
    %63 = vector.shape_cast %62 : vector<32xf32> to vector<1x1x32xf32>
    %cst_22 = arith.constant 1.800000e+01 : f32
    %64 = vector.broadcast %cst_22 : f32 to vector<1x1x32xf32>
    %65 = arith.divf %63, %64 : vector<1x1x32xf32>
    %66 = arith.mulf %60, %60 : vector<1x1x32xf32>
    %67 = arith.subf %65, %66 : vector<1x1x32xf32>
    %68 = vector.broadcast %60 : vector<1x1x32xf32> to vector<2x9x32xf32>
    %69 = arith.subf %54, %68 : vector<2x9x32xf32>
    %70 = vector.shape_cast %55 : vector<1x32xf32> to vector<1x1x32xf32>
    %71 = vector.broadcast %70 : vector<1x1x32xf32> to vector<2x9x32xf32>
    %72 = arith.mulf %71, %69 : vector<2x9x32xf32>
    %cst_23 = arith.constant 9.99999974E-6 : f32
    %73 = vector.broadcast %cst_23 : f32 to vector<1x1x32xf32>
    %74 = arith.addf %67, %73 : vector<1x1x32xf32>
    %75 = math.rsqrt %74 : vector<1x1x32xf32>
    %76 = vector.broadcast %75 : vector<1x1x32xf32> to vector<2x9x32xf32>
    %77 = arith.mulf %72, %76 : vector<2x9x32xf32>
    %78 = vector.shape_cast %56 : vector<1x32xf32> to vector<1x1x32xf32>
    %79 = vector.broadcast %78 : vector<1x1x32xf32> to vector<2x9x32xf32>
    %80 = arith.addf %77, %79 : vector<2x9x32xf32>
    %cst_24 = arith.constant 0.000000e+00 : f32
    %81 = vector.broadcast %cst_24 : f32 to vector<2x9x32xf32>
    %82 = arith.maximumf %80, %81 : vector<2x9x32xf32>
    %83 = vector.extract_strided_slice %82 {offsets = [0, 0, 0], sizes = [2, 8, 32], strides = [1, 1, 1]} : vector<2x9x32xf32> to vector<2x8x32xf32>
    %84 = vector.extract_strided_slice %82 {offsets = [0, 1, 0], sizes = [2, 8, 32], strides = [1, 1, 1]} : vector<2x9x32xf32> to vector<2x8x32xf32>
    %85 = tpu.concatenate %83, %84 in 2 : vector<2x8x32xf32>, vector<2x8x32xf32> -> vector<2x8x64xf32>
    %c32 = arith.constant 32 : index
    %c0_25 = arith.constant 0 : index
    %86 = vector.load %arg1[%c32, %c0_25] : memref<1248x128xf32, #tpu.memory_space<vmem>>, vector<64x64xf32>
    "tpu.trace_start"() <{level = 10 : i32, message = "blc,co->blo"}> : () -> ()
    %cst_26 = arith.constant dense<0.000000e+00> : vector<2x8x64xf32>
    %87 = tpu.matmul %85, %86, %cst_26 {dimension_numbers = #tpu.dot_dimension_numbers<[2], [0], [0, 1], [1], [0, 0, 0, 1, 1, 1], [], []>} : vector<2x8x64xf32>, vector<64x64xf32>, vector<2x8x64xf32> -> vector<2x8x64xf32>
    "tpu.trace_stop"() : () -> ()
    %c8 = arith.constant 8 : index
    %c0_27 = arith.constant 0 : index
    %88 = vector.load %arg2[%c8, %c0_27] : memref<24x128xf32, #tpu.memory_space<vmem>>, vector<1x64xf32>
    %89 = vector.shape_cast %88 : vector<1x64xf32> to vector<1x1x64xf32>
    %90 = vector.broadcast %89 : vector<1x1x64xf32> to vector<2x8x64xf32>
    %91 = arith.addf %87, %90 : vector<2x8x64xf32>
    %c9 = arith.constant 9 : index
    %c0_28 = arith.constant 0 : index
    %92 = vector.load %arg2[%c9, %c0_28] : memref<24x128xf32, #tpu.memory_space<vmem>>, vector<1x64xf32>
    %c10 = arith.constant 10 : index
    %c0_29 = arith.constant 0 : index
    %93 = vector.load %arg2[%c10, %c0_29] : memref<24x128xf32, #tpu.memory_space<vmem>>, vector<1x64xf32>
    %cst_30 = arith.constant dense<0.000000e+00> : vector<64xf32>
    %94 = vector.multi_reduction <add>, %91, %cst_30 [0, 1] : vector<2x8x64xf32> to vector<64xf32>
    %95 = vector.shape_cast %94 : vector<64xf32> to vector<1x1x64xf32>
    %cst_31 = arith.constant 1.600000e+01 : f32
    %96 = vector.broadcast %cst_31 : f32 to vector<1x1x64xf32>
    %97 = arith.divf %95, %96 : vector<1x1x64xf32>
    %98 = arith.mulf %91, %91 : vector<2x8x64xf32>
    %cst_32 = arith.constant dense<0.000000e+00> : vector<64xf32>
    %99 = vector.multi_reduction <add>, %98, %cst_32 [0, 1] : vector<2x8x64xf32> to vector<64xf32>
    %100 = vector.shape_cast %99 : vector<64xf32> to vector<1x1x64xf32>
    %cst_33 = arith.constant 1.600000e+01 : f32
    %101 = vector.broadcast %cst_33 : f32 to vector<1x1x64xf32>
    %102 = arith.divf %100, %101 : vector<1x1x64xf32>
    %103 = arith.mulf %97, %97 : vector<1x1x64xf32>
    %104 = arith.subf %102, %103 : vector<1x1x64xf32>
    %105 = vector.broadcast %97 : vector<1x1x64xf32> to vector<2x8x64xf32>
    %106 = arith.subf %91, %105 : vector<2x8x64xf32>
    %107 = vector.shape_cast %92 : vector<1x64xf32> to vector<1x1x64xf32>
    %108 = vector.broadcast %107 : vector<1x1x64xf32> to vector<2x8x64xf32>
    %109 = arith.mulf %108, %106 : vector<2x8x64xf32>
    %cst_34 = arith.constant 9.99999974E-6 : f32
    %110 = vector.broadcast %cst_34 : f32 to vector<1x1x64xf32>
    %111 = arith.addf %104, %110 : vector<1x1x64xf32>
    %112 = math.rsqrt %111 : vector<1x1x64xf32>
    %113 = vector.broadcast %112 : vector<1x1x64xf32> to vector<2x8x64xf32>
    %114 = arith.mulf %109, %113 : vector<2x8x64xf32>
    %115 = vector.shape_cast %93 : vector<1x64xf32> to vector<1x1x64xf32>
    %116 = vector.broadcast %115 : vector<1x1x64xf32> to vector<2x8x64xf32>
    %117 = arith.addf %114, %116 : vector<2x8x64xf32>
    %cst_35 = arith.constant 0.000000e+00 : f32
    %118 = vector.broadcast %cst_35 : f32 to vector<2x8x64xf32>
    %119 = arith.maximumf %117, %118 : vector<2x8x64xf32>
    %120 = vector.extract_strided_slice %119 {offsets = [0, 0, 0], sizes = [2, 7, 64], strides = [1, 1, 1]} : vector<2x8x64xf32> to vector<2x7x64xf32>
    %121 = vector.extract_strided_slice %119 {offsets = [0, 1, 0], sizes = [2, 7, 64], strides = [1, 1, 1]} : vector<2x8x64xf32> to vector<2x7x64xf32>
    %122 = tpu.concatenate %120, %121 in 2 : vector<2x7x64xf32>, vector<2x7x64xf32> -> vector<2x7x128xf32>
    %c96 = arith.constant 96 : index
    %c0_36 = arith.constant 0 : index
    %123 = vector.load %arg1[%c96, %c0_36] : memref<1248x128xf32, #tpu.memory_space<vmem>>, vector<128x128xf32>
    "tpu.trace_start"() <{level = 10 : i32, message = "blc,co->blo"}> : () -> ()
    %cst_37 = arith.constant dense<0.000000e+00> : vector<2x7x128xf32>
    %124 = tpu.matmul %122, %123, %cst_37 {dimension_numbers = #tpu.dot_dimension_numbers<[2], [0], [0, 1], [1], [0, 0, 0, 1, 1, 1], [], []>} : vector<2x7x128xf32>, vector<128x128xf32>, vector<2x7x128xf32> -> vector<2x7x128xf32>
    "tpu.trace_stop"() : () -> ()
    %c11 = arith.constant 11 : index
    %c0_38 = arith.constant 0 : index
    %125 = vector.load %arg2[%c11, %c0_38] : memref<24x128xf32, #tpu.memory_space<vmem>>, vector<1x128xf32>
    %126 = vector.shape_cast %125 : vector<1x128xf32> to vector<1x1x128xf32>
    %127 = vector.broadcast %126 : vector<1x1x128xf32> to vector<2x7x128xf32>
    %128 = arith.addf %124, %127 : vector<2x7x128xf32>
    %c12 = arith.constant 12 : index
    %c0_39 = arith.constant 0 : index
    %129 = vector.load %arg2[%c12, %c0_39] : memref<24x128xf32, #tpu.memory_space<vmem>>, vector<1x128xf32>
    %c13 = arith.constant 13 : index
    %c0_40 = arith.constant 0 : index
    %130 = vector.load %arg2[%c13, %c0_40] : memref<24x128xf32, #tpu.memory_space<vmem>>, vector<1x128xf32>
    %cst_41 = arith.constant dense<0.000000e+00> : vector<128xf32>
    %131 = vector.multi_reduction <add>, %128, %cst_41 [0, 1] : vector<2x7x128xf32> to vector<128xf32>
    %132 = vector.shape_cast %131 : vector<128xf32> to vector<1x1x128xf32>
    %cst_42 = arith.constant 1.400000e+01 : f32
    %133 = vector.broadcast %cst_42 : f32 to vector<1x1x128xf32>
    %134 = arith.divf %132, %133 : vector<1x1x128xf32>
    %135 = arith.mulf %128, %128 : vector<2x7x128xf32>
    %cst_43 = arith.constant dense<0.000000e+00> : vector<128xf32>
    %136 = vector.multi_reduction <add>, %135, %cst_43 [0, 1] : vector<2x7x128xf32> to vector<128xf32>
    %137 = vector.shape_cast %136 : vector<128xf32> to vector<1x1x128xf32>
    %cst_44 = arith.constant 1.400000e+01 : f32
    %138 = vector.broadcast %cst_44 : f32 to vector<1x1x128xf32>
    %139 = arith.divf %137, %138 : vector<1x1x128xf32>
    %140 = arith.mulf %134, %134 : vector<1x1x128xf32>
    %141 = arith.subf %139, %140 : vector<1x1x128xf32>
    %142 = vector.broadcast %134 : vector<1x1x128xf32> to vector<2x7x128xf32>
    %143 = arith.subf %128, %142 : vector<2x7x128xf32>
    %144 = vector.shape_cast %129 : vector<1x128xf32> to vector<1x1x128xf32>
    %145 = vector.broadcast %144 : vector<1x1x128xf32> to vector<2x7x128xf32>
    %146 = arith.mulf %145, %143 : vector<2x7x128xf32>
    %cst_45 = arith.constant 9.99999974E-6 : f32
    %147 = vector.broadcast %cst_45 : f32 to vector<1x1x128xf32>
    %148 = arith.addf %141, %147 : vector<1x1x128xf32>
    %149 = math.rsqrt %148 : vector<1x1x128xf32>
    %150 = vector.broadcast %149 : vector<1x1x128xf32> to vector<2x7x128xf32>
    %151 = arith.mulf %146, %150 : vector<2x7x128xf32>
    %152 = vector.shape_cast %130 : vector<1x128xf32> to vector<1x1x128xf32>
    %153 = vector.broadcast %152 : vector<1x1x128xf32> to vector<2x7x128xf32>
    %154 = arith.addf %151, %153 : vector<2x7x128xf32>
    %cst_46 = arith.constant 0.000000e+00 : f32
    %155 = vector.broadcast %cst_46 : f32 to vector<2x7x128xf32>
    %156 = arith.maximumf %154, %155 : vector<2x7x128xf32>
    %157 = vector.extract_strided_slice %156 {offsets = [0, 0, 0], sizes = [2, 1, 128], strides = [1, 1, 1]} : vector<2x7x128xf32> to vector<2x1x128xf32>
    %158 = vector.shape_cast %157 : vector<2x1x128xf32> to vector<2x128xf32>
    %159 = vector.extract_strided_slice %156 {offsets = [0, 1, 0], sizes = [2, 1, 128], strides = [1, 1, 1]} : vector<2x7x128xf32> to vector<2x1x128xf32>
    %160 = vector.shape_cast %159 : vector<2x1x128xf32> to vector<2x128xf32>
    %161 = vector.extract_strided_slice %156 {offsets = [0, 2, 0], sizes = [2, 1, 128], strides = [1, 1, 1]} : vector<2x7x128xf32> to vector<2x1x128xf32>
    %162 = vector.shape_cast %161 : vector<2x1x128xf32> to vector<2x128xf32>
    %163 = vector.extract_strided_slice %156 {offsets = [0, 3, 0], sizes = [2, 1, 128], strides = [1, 1, 1]} : vector<2x7x128xf32> to vector<2x1x128xf32>
    %164 = vector.shape_cast %163 : vector<2x1x128xf32> to vector<2x128xf32>
    %165 = vector.extract_strided_slice %156 {offsets = [0, 4, 0], sizes = [2, 1, 128], strides = [1, 1, 1]} : vector<2x7x128xf32> to vector<2x1x128xf32>
    %166 = vector.shape_cast %165 : vector<2x1x128xf32> to vector<2x128xf32>
    %167 = vector.extract_strided_slice %156 {offsets = [0, 5, 0], sizes = [2, 1, 128], strides = [1, 1, 1]} : vector<2x7x128xf32> to vector<2x1x128xf32>
    %168 = vector.shape_cast %167 : vector<2x1x128xf32> to vector<2x128xf32>
    %169 = vector.extract_strided_slice %156 {offsets = [0, 6, 0], sizes = [2, 1, 128], strides = [1, 1, 1]} : vector<2x7x128xf32> to vector<2x1x128xf32>
    %170 = vector.shape_cast %169 : vector<2x1x128xf32> to vector<2x128xf32>
    %171 = tpu.concatenate %158, %160, %162, %164, %166, %168, %170 in 1 : vector<2x128xf32>, vector<2x128xf32>, vector<2x128xf32>, vector<2x128xf32>, vector<2x128xf32>, vector<2x128xf32>, vector<2x128xf32> -> vector<2x896xf32>
    %c224 = arith.constant 224 : index
    %c0_47 = arith.constant 0 : index
    %172 = vector.load %arg1[%c224, %c0_47] : memref<1248x128xf32, #tpu.memory_space<vmem>>, vector<896x128xf32>
    %cst_48 = arith.constant dense<0.000000e+00> : vector<2x128xf32>
    %173 = tpu.matmul %171, %172, %cst_48 {dimension_numbers = #tpu.dot_dimension_numbers<[1], [0], [0], [1], [0, 0, 1, 1], [], []>} : vector<2x896xf32>, vector<896x128xf32>, vector<2x128xf32> -> vector<2x128xf32>
    %c14 = arith.constant 14 : index
    %c0_49 = arith.constant 0 : index
    %174 = vector.load %arg2[%c14, %c0_49] : memref<24x128xf32, #tpu.memory_space<vmem>>, vector<1x128xf32>
    %175 = vector.broadcast %174 : vector<1x128xf32> to vector<2x128xf32>
    %176 = arith.addf %173, %175 : vector<2x128xf32>
    %c15 = arith.constant 15 : index
    %c0_50 = arith.constant 0 : index
    %177 = vector.load %arg2[%c15, %c0_50] : memref<24x128xf32, #tpu.memory_space<vmem>>, vector<1x128xf32>
    %c16 = arith.constant 16 : index
    %c0_51 = arith.constant 0 : index
    %178 = vector.load %arg2[%c16, %c0_51] : memref<24x128xf32, #tpu.memory_space<vmem>>, vector<1x128xf32>
    %cst_52 = arith.constant dense<0.000000e+00> : vector<128xf32>
    %179 = vector.multi_reduction <add>, %176, %cst_52 [0] : vector<2x128xf32> to vector<128xf32>
    %180 = vector.shape_cast %179 : vector<128xf32> to vector<1x128xf32>
    %cst_53 = arith.constant 2.000000e+00 : f32
    %181 = vector.broadcast %cst_53 : f32 to vector<1x128xf32>
    %182 = arith.divf %180, %181 : vector<1x128xf32>
    %183 = arith.mulf %176, %176 : vector<2x128xf32>
    %cst_54 = arith.constant dense<0.000000e+00> : vector<128xf32>
    %184 = vector.multi_reduction <add>, %183, %cst_54 [0] : vector<2x128xf32> to vector<128xf32>
    %185 = vector.shape_cast %184 : vector<128xf32> to vector<1x128xf32>
    %cst_55 = arith.constant 2.000000e+00 : f32
    %186 = vector.broadcast %cst_55 : f32 to vector<1x128xf32>
    %187 = arith.divf %185, %186 : vector<1x128xf32>
    %188 = arith.mulf %182, %182 : vector<1x128xf32>
    %189 = arith.subf %187, %188 : vector<1x128xf32>
    %190 = vector.broadcast %182 : vector<1x128xf32> to vector<2x128xf32>
    %191 = arith.subf %176, %190 : vector<2x128xf32>
    %192 = vector.broadcast %177 : vector<1x128xf32> to vector<2x128xf32>
    %193 = arith.mulf %192, %191 : vector<2x128xf32>
    %cst_56 = arith.constant 9.99999974E-6 : f32
    %194 = vector.broadcast %cst_56 : f32 to vector<1x128xf32>
    %195 = arith.addf %189, %194 : vector<1x128xf32>
    %196 = math.rsqrt %195 : vector<1x128xf32>
    %197 = vector.broadcast %196 : vector<1x128xf32> to vector<2x128xf32>
    %198 = arith.mulf %193, %197 : vector<2x128xf32>
    %199 = vector.broadcast %178 : vector<1x128xf32> to vector<2x128xf32>
    %200 = arith.addf %198, %199 : vector<2x128xf32>
    %cst_57 = arith.constant 0.000000e+00 : f32
    %201 = vector.broadcast %cst_57 : f32 to vector<2x128xf32>
    %202 = arith.maximumf %200, %201 : vector<2x128xf32>
    %c1120 = arith.constant 1120 : index
    %c0_58 = arith.constant 0 : index
    %203 = vector.load %arg1[%c1120, %c0_58] : memref<1248x128xf32, #tpu.memory_space<vmem>>, vector<128x128xf32>
    %cst_59 = arith.constant dense<0.000000e+00> : vector<2x128xf32>
    %204 = tpu.matmul %202, %203, %cst_59 {dimension_numbers = #tpu.dot_dimension_numbers<[1], [0], [0], [1], [0, 0, 1, 1], [], []>} : vector<2x128xf32>, vector<128x128xf32>, vector<2x128xf32> -> vector<2x128xf32>
    %c17 = arith.constant 17 : index
    %c0_60 = arith.constant 0 : index
    %205 = vector.load %arg2[%c17, %c0_60] : memref<24x128xf32, #tpu.memory_space<vmem>>, vector<1x128xf32>
    %206 = vector.broadcast %205 : vector<1x128xf32> to vector<2x128xf32>
    %207 = arith.addf %204, %206 : vector<2x128xf32>
    %c0_61 = arith.constant 0 : index
    %c0_62 = arith.constant 0 : index
    %208 = vector.load %arg3[%c0_61, %c0_62] : memref<2x128xf32, #tpu.memory_space<vmem>>, vector<2x128xf32>
    tpu.vector_store %arg3[%c0_61, %c0_62], %207 {strides = array<i32>} : memref<2x128xf32, #tpu.memory_space<vmem>>, vector<2x128xf32>,
    return
  }
}

</mosaic_0001>

<llo_original>
// kernel: cnn1d_batchnorm_forward.1
$region0: #{cnn1d_batchnorm_forward.1}
  #allocation0 [shape = 'u32[]', space=smem, size = 0x4, offset = 0x4, fixed_abs, tag = 'smem constant byte address 0x4 - core index']
  #allocation1 [shape = 'u32[144,128]{1,0:T(1,128)}', space=vmem, size = 0x12000, scoped, tag = 'internal scratch']
  %s0 = inlined_call_operand.vmem [shape: f32[2,11,1], index: 0, kind: input, shape index: {}]
  %s1 = inlined_call_operand.vmem [shape: f32[1248,128], index: 1, kind: input, shape index: {}]
  %s2 = inlined_call_operand.vmem [shape: f32[24,128], index: 2, kind: input, shape index: {}]
  %s3 = inlined_call_operand.hbm [shape: f32[2,128], index: 3, kind: output, shape index: {}]
  %s4 = sld [smem:[#allocation0]]
  $region22: #{cnn1d_batchnorm_forward.1} parent=0
    _
  %s6 = ssub.s32 1, %s4
  %s7 = scalar_select 0, %s6, %s4
  $region1: #{cnn1d_batchnorm_forward.1} parent=0
    #allocation2 [shape = 'u8[1024]{0}', space=vmem, size = 0x400, scoped, tag = 'output window, operand 0, single buffered']
    #allocation3 [shape = 's32[1]{0}', space=sflag, size = 0x4, scoped, tag = 'scoped memory for cnn1d_batchnorm_forward.1']
    %8 = vsyncpa [#allocation3], 0
    // Predicated region
    $region2: #{cnn1d_batchnorm_forward.1} parent=1 // pred_check
      _
    $region3: #{cnn1d_batchnorm_forward.1} parent=1 // pred_check_branch
      %10 = sbr.rel (0) target = $region5
    $region4: #{cnn1d_batchnorm_forward.1} parent=1 // pred_region
      _
    $region5: #{cnn1d_batchnorm_forward.1} parent=1 // pred_fallthru
      _
    // Predicated region
    $region6: #{cnn1d_batchnorm_forward.1} parent=1 // pred_check
      _
    $region7: #{cnn1d_batchnorm_forward.1} parent=1 // pred_check_branch
      %12 = sbr.rel (0) target = $region9
    $region8: #{cnn1d_batchnorm_forward.1} parent=1 // pred_region
      _
    $region9: #{cnn1d_batchnorm_forward.1} parent=1 // pred_fallthru
      _
    // Predicated region
    $region10: #{cnn1d_batchnorm_forward.1} parent=1 // pred_check
      _
    $region11: #{cnn1d_batchnorm_forward.1} parent=1 // pred_check_branch
      %14 = sbr.rel (0) target = $region13
    $region12: #{cnn1d_batchnorm_forward.1} parent=1 // pred_region
      _
    $region13: #{cnn1d_batchnorm_forward.1} parent=1 // pred_fallthru
      _
    %v15 = vld [vmem:[%s0] sm:$0xff]
    %v16 = vld [vmem:[%s0 + $0x8] sm:$0x7]
    %v17 = vld [vmem:[%s0 + $0x10] sm:$0xff]
    %v18 = vld [vmem:[%s0 + $0x18] sm:$0x7]
    %v19 = vld [vmem:[%s2] sm:$0x1]
    %21 = vset.pattern.permute.xlu0 0
    %22 = vperm.xlu0 %21, %v15
    %v23 = vpop.permute.xlu0 %22
    %26 = vset.pattern.permute.xlu0 0
    %27 = vperm.xlu0 %26, %v16
    %v28 = vpop.permute.xlu0 %27
    %31 = vset.pattern.permute.xlu0 0
    %32 = vperm.xlu0 %31, %v17
    %v33 = vpop.permute.xlu0 %32
    %36 = vset.pattern.permute.xlu0 0
    %37 = vperm.xlu0 %36, %v18
    %v38 = vpop.permute.xlu0 %37
    %v40 = vlaneseq
    %v41 = vshrl.u32 %v40, 7
    %v42 = vsub.s32 0, %v41
    %v43 = vrot.slane %v19, %v42
    %v44 = vmul.f32 %v23, %v43
    %v45 = vmul.f32 %v28, %v43
    %v46 = vmul.f32 %v33, %v43
    %v47 = vmul.f32 %v38, %v43
    %v48 = vld [vmem:[%s2 + $0x2] sm:$0x1]
    %v49 = vlaneseq
    %v50 = vshrl.u32 %v49, 7
    %v51 = vsub.s32 0, %v50
    %v52 = vrot.slane %v48, %v51
    %v53 = vadd.f32 %v44, %v52
    %v54 = vadd.f32 %v45, %v52
    %v55 = vadd.f32 %v46, %v52
    %v56 = vadd.f32 %v47, %v52
    %v57 = vld [vmem:[%s2 + $0x1] sm:$0x1]
    %v58 = vlaneseq
    %v59 = vshrl.u32 %v58, 7
    %v60 = vsub.s32 0, %v59
    %v61 = vrot.slane %v57, %v60
    %v62 = vmul.f32 %v23, %v61
    %v63 = vmul.f32 %v28, %v61
    %v64 = vmul.f32 %v33, %v61
    %v65 = vmul.f32 %v38, %v61
    %vm70 = vcmask 1046528
    %v71 = vrot.slane %v62, 1
    %v72 = vrot.slane %v63, 1
    %v73 = vsel %vm70, %v71, %v72
    %v74 = vrot.slane %v64, 1
    %v75 = vrot.slane %v65, 1
    %v76 = vsel %vm70, %v74, %v75
    %v81 = vadd.f32 %v53, %v73
    %v82 = vadd.f32 %v54, %v72
    %v83 = vadd.f32 %v55, %v76
    %v84 = vadd.f32 %v56, %v75
    %v85 = vld [vmem:[%s2 + $0x3] sm:$0x1]
    %v86 = vld [vmem:[%s2 + $0x4] sm:$0x1]
    %vm87 = vcmask 130048
    %v88 = vsel %vm87, %v81, 0.0
    %vm89 = vcmask 123904
    %v90 = vsel %vm89, %v82, 0.0
    %v91 = vadd.f32 %v88, %v90
    %v92 = vsel %vm87, %v83, 0.0
    %v93 = vadd.f32 %v91, %v92
    %v94 = vsel %vm89, %v84, 0.0
    %v95 = vadd.f32 %v93, %v94
    %v96 = vrot.slane %v95, 4
    %v97 = vadd.f32 %v95, %v96
    %v98 = vrot.slane %v97, 2
    %v99 = vadd.f32 %v97, %v98
    %v100 = vrot.slane %v99, 1
    %v101 = vadd.f32 %v99, %v100
    %v102 = vrcp.pop 20.0
    %v103 = vmul.f32 %v101, %v102
    %v104 = vmul.f32 %v81, %v81
    %v105 = vmul.f32 %v82, %v82
    %v106 = vmul.f32 %v83, %v83
    %v107 = vmul.f32 %v84, %v84
    %v108 = vsel %vm87, %v104, 0.0
    %v109 = vsel %vm89, %v105, 0.0
    %v110 = vadd.f32 %v108, %v109
    %v111 = vsel %vm87, %v106, 0.0
    %v112 = vadd.f32 %v110, %v111
    %v113 = vsel %vm89, %v107, 0.0
    %v114 = vadd.f32 %v112, %v113
    %v115 = vrot.slane %v114, 4
    %v116 = vadd.f32 %v114, %v115
    %v117 = vrot.slane %v116, 2
    %v118 = vadd.f32 %v116, %v117
    %v119 = vrot.slane %v118, 1
    %v120 = vadd.f32 %v118, %v119
    %v121 = vmul.f32 %v120, %v102
    %v122 = vmul.f32 %v103, %v103
    %v123 = vsub.f32 %v121, %v122
    %v124 = vsub.f32 %v81, %v103
    %v125 = vsub.f32 %v82, %v103
    %v126 = vsub.f32 %v83, %v103
    %v127 = vsub.f32 %v84, %v103
    %v128 = vlaneseq
    %v129 = vshrl.u32 %v128, 7
    %v130 = vsub.s32 0, %v129
    %v131 = vrot.slane %v85, %v130
    %v132 = vmul.f32 %v131, %v124
    %v133 = vmul.f32 %v131, %v125
    %v134 = vmul.f32 %v131, %v126
    %v135 = vmul.f32 %v131, %v127
    %v136 = vadd.f32 %v123, 1e-05
    %v137 = vrsqrt.pop %v136
    %v138 = vmul.f32 %v132, %v137
    %v139 = vmul.f32 %v133, %v137
    %v140 = vmul.f32 %v134, %v137
    %v141 = vmul.f32 %v135, %v137
    %v142 = vlaneseq
    %v143 = vshrl.u32 %v142, 7
    %v144 = vsub.s32 0, %v143
    %v145 = vrot.slane %v86, %v144
    %v146 = vadd.f32 %v138, %v145
    %v147 = vadd.f32 %v139, %v145
    %v148 = vadd.f32 %v140, %v145
    %v149 = vadd.f32 %v141, %v145
    %v150 = vmax.f32 %v146, 0.0
    %v151 = vmax.f32 %v147, 0.0
    %v152 = vmax.f32 %v148, 0.0
    %v153 = vmax.f32 %v149, 0.0
    %v158 = vrot.slane %v150, 1
    %v159 = vrot.slane %v151, 1
    %v160 = vsel %vm70, %v158, %v159
    %v161 = vrot.slane %v152, 1
    %v162 = vrot.slane %v153, 1
    %v163 = vsel %vm70, %v161, %v162
    %164 = vrot.lane.b32.xlu0 %v160, 16
    %v165 = vpop.permute.xlu0 %164
    %166 = vrot.lane.b32.xlu0 %v159, 16
    %v167 = vpop.permute.xlu0 %166
    %168 = vrot.lane.b32.xlu0 %v163, 16
    %v169 = vpop.permute.xlu0 %168
    %170 = vrot.lane.b32.xlu0 %v162, 16
    %v171 = vpop.permute.xlu0 %170
    %v176 = vsel %vm87, %v150, %v165
    %v177 = vsel %vm87, %v151, %v167
    %v178 = vsel %vm87, %v152, %v169
    %v179 = vsel %vm87, %v153, %v171
    %v180 = vld [vmem:[%s1] sm:$0xff]
    %v181 = vld [vmem:[%s1 + $0x8] sm:$0xff]
    %v182 = vld [vmem:[%s1 + $0x10] sm:$0xff]
    %v183 = vld [vmem:[%s1 + $0x18] sm:$0xff]
    %v184 = vld [vmem:[%s2 + $0x5] sm:$0x1]
    %v185 = vlaneseq
    %v186 = vshrl.u32 %v185, 7
    %v187 = vsub.s32 0, %v186
    %v188 = vrot.slane %v184, %v187
    %v193 = vcombine.high %v176, %v176
    %v195 = vunpack.c.l.s4 1966171168
    %v196 = vunpack.c.0.s8 %v195
    %v197 = vlaneseq
    %v198 = vshrl.u32 %v197, 7
    %v199 = vsub.s32 %v196, %v198
    %v200 = vrot.slane %v176, %v199
    %v202 = vunpack.c.l.s4 1966171168
    %v203 = vunpack.c.0.s8 %v202
    %v204 = vlaneseq
    %v205 = vshrl.u32 %v204, 7
    %v206 = vsub.s32 %v203, %v205
    %v207 = vrot.slane %v193, %v206
    %v208 = vcombine.high %v200, %v200
    %v209 = vcombine.high %v207, %v207
    %v211 = vunpack.c.l.s4 1966171168
    %v212 = vunpack.c.0.s8 %v211
    %v213 = vlaneseq
    %v214 = vshrl.u32 %v213, 7
    %v215 = vsub.s32 %v212, %v214
    %v216 = vrot.slane %v200, %v215
    %v218 = vunpack.c.l.s4 1966171168
    %v219 = vunpack.c.0.s8 %v218
    %v220 = vlaneseq
    %v221 = vshrl.u32 %v220, 7
    %v222 = vsub.s32 %v219, %v221
    %v223 = vrot.slane %v207, %v222
    %v225 = vunpack.c.l.s4 1966171168
    %v226 = vunpack.c.0.s8 %v225
    %v227 = vlaneseq
    %v228 = vshrl.u32 %v227, 7
    %v229 = vsub.s32 %v226, %v228
    %v230 = vrot.slane %v208, %v229
    %v232 = vunpack.c.l.s4 1966171168
    %v233 = vunpack.c.0.s8 %v232
    %v234 = vlaneseq
    %v235 = vshrl.u32 %v234, 7
    %v236 = vsub.s32 %v233, %v235
    %v237 = vrot.slane %v209, %v236
    %v238 = vcombine.high %v216, %v216
    %v239 = vcombine.high %v223, %v223
    %v240 = vcombine.high %v230, %v230
    %v241 = vcombine.high %v237, %v237
    %v243 = vunpack.c.l.s4 1966171168
    %v244 = vunpack.c.0.s8 %v243
    %v245 = vlaneseq
    %v246 = vshrl.u32 %v245, 7
    %v247 = vsub.s32 %v244, %v246
    %v248 = vrot.slane %v177, %v247
    %v250 = vunpack.c.l.s4 1966171168
    %v251 = vunpack.c.0.s8 %v250
    %v252 = vlaneseq
    %v253 = vshrl.u32 %v252, 7
    %v254 = vsub.s32 %v251, %v253
    %v255 = vrot.slane %v248, %v254
    %v256 = vcombine.high %v178, %v178
    %v258 = vunpack.c.l.s4 1966171168
    %v259 = vunpack.c.0.s8 %v258
    %v260 = vlaneseq
    %v261 = vshrl.u32 %v260, 7
    %v262 = vsub.s32 %v259, %v261
    %v263 = vrot.slane %v178, %v262
    %v265 = vunpack.c.l.s4 1966171168
    %v266 = vunpack.c.0.s8 %v265
    %v267 = vlaneseq
    %v268 = vshrl.u32 %v267, 7
    %v269 = vsub.s32 %v266, %v268
    %v270 = vrot.slane %v256, %v269
    %v271 = vcombine.high %v263, %v263
    %v272 = vcombine.high %v270, %v270
    %v274 = vunpack.c.l.s4 1966171168
    %v275 = vunpack.c.0.s8 %v274
    %v276 = vlaneseq
    %v277 = vshrl.u32 %v276, 7
    %v278 = vsub.s32 %v275, %v277
    %v279 = vrot.slane %v263, %v278
    %v281 = vunpack.c.l.s4 1966171168
    %v282 = vunpack.c.0.s8 %v281
    %v283 = vlaneseq
    %v284 = vshrl.u32 %v283, 7
    %v285 = vsub.s32 %v282, %v284
    %v286 = vrot.slane %v270, %v285
    %v288 = vunpack.c.l.s4 1966171168
    %v289 = vunpack.c.0.s8 %v288
    %v290 = vlaneseq
    %v291 = vshrl.u32 %v290, 7
    %v292 = vsub.s32 %v289, %v291
    %v293 = vrot.slane %v271, %v292
    %v295 = vunpack.c.l.s4 1966171168
    %v296 = vunpack.c.0.s8 %v295
    %v297 = vlaneseq
    %v298 = vshrl.u32 %v297, 7
    %v299 = vsub.s32 %v296, %v298
    %v300 = vrot.slane %v272, %v299
    %v301 = vcombine.high %v279, %v279
    %v302 = vcombine.high %v286, %v286
    %v303 = vcombine.high %v293, %v293
    %v304 = vcombine.high %v300, %v300
    %v306 = vunpack.c.l.s4 1966171168
    %v307 = vunpack.c.0.s8 %v306
    %v308 = vlaneseq
    %v309 = vshrl.u32 %v308, 7
    %v310 = vsub.s32 %v307, %v309
    %v311 = vrot.slane %v179, %v310
    %v313 = vunpack.c.l.s4 1966171168
    %v314 = vunpack.c.0.s8 %v313
    %v315 = vlaneseq
    %v316 = vshrl.u32 %v315, 7
    %v317 = vsub.s32 %v314, %v316
    %v318 = vrot.slane %v311, %v317
    %v320 = vcombine.high %v188, %v188
    %v322 = vunpack.c.l.s4 1966171168
    %v323 = vunpack.c.0.s8 %v322
    %v324 = vlaneseq
    %v325 = vshrl.u32 %v324, 7
    %v326 = vsub.s32 %v323, %v325
    %v327 = vrot.slane %v188, %v326
    %v329 = vunpack.c.l.s4 1966171168
    %v330 = vunpack.c.0.s8 %v329
    %v331 = vlaneseq
    %v332 = vshrl.u32 %v331, 7
    %v333 = vsub.s32 %v330, %v332
    %v334 = vrot.slane %v320, %v333
    %v335 = vcombine.high %v327, %v327
    %v336 = vcombine.high %v334, %v334
    %v338 = vunpack.c.l.s4 1966171168
    %v339 = vunpack.c.0.s8 %v338
    %v340 = vlaneseq
    %v341 = vshrl.u32 %v340, 7
    %v342 = vsub.s32 %v339, %v341
    %v343 = vrot.slane %v327, %v342
    %v345 = vunpack.c.l.s4 1966171168
    %v346 = vunpack.c.0.s8 %v345
    %v347 = vlaneseq
    %v348 = vshrl.u32 %v347, 7
    %v349 = vsub.s32 %v346, %v348
    %v350 = vrot.slane %v334, %v349
    %v352 = vunpack.c.l.s4 1966171168
    %v353 = vunpack.c.0.s8 %v352
    %v354 = vlaneseq
    %v355 = vshrl.u32 %v354, 7
    %v356 = vsub.s32 %v353, %v355
    %v357 = vrot.slane %v335, %v356
    %v359 = vunpack.c.l.s4 1966171168
    %v360 = vunpack.c.0.s8 %v359
    %v361 = vlaneseq
    %v362 = vshrl.u32 %v361, 7
    %v363 = vsub.s32 %v360, %v362
    %v364 = vrot.slane %v336, %v363
    %v365 = vcombine.high %v343, %v343
    %v366 = vcombine.high %v350, %v350
    %v367 = vcombine.high %v357, %v357
    %v368 = vcombine.high %v364, %v364
    %v369 = vcombine.low %v216, %v230
    %v370 = vcombine.low %v238, %v240
    %v371 = vcombine.low %v223, %v237
    %v372 = vcombine.low %v239, %v241
    %v374 = vunpack.c.l.s4 1966171168
    %v375 = vunpack.c.0.s8 %v374
    %v376 = vlaneseq
    %v377 = vshrl.u32 %v376, 7
    %v378 = vsub.s32 %v375, %v377
    %v379 = vrot.slane %v369, %v378
    %v381 = vunpack.c.l.s4 1966171168
    %v382 = vunpack.c.0.s8 %v381
    %v383 = vlaneseq
    %v384 = vshrl.u32 %v383, 7
    %v385 = vsub.s32 %v382, %v384
    %v386 = vrot.slane %v370, %v385
    %v388 = vunpack.c.l.s4 1966171168
    %v389 = vunpack.c.0.s8 %v388
    %v390 = vlaneseq
    %v391 = vshrl.u32 %v390, 7
    %v392 = vsub.s32 %v389, %v391
    %v393 = vrot.slane %v371, %v392
    %v395 = vunpack.c.l.s4 1966171168
    %v396 = vunpack.c.0.s8 %v395
    %v397 = vlaneseq
    %v398 = vshrl.u32 %v397, 7
    %v399 = vsub.s32 %v396, %v398
    %v400 = vrot.slane %v372, %v399
    %v401 = vcombine.low %v379, %v386
    %v402 = vcombine.low %v393, %v400
    %v404 = vunpack.c.l.s4 1966171168
    %v405 = vunpack.c.0.s8 %v404
    %v406 = vlaneseq
    %v407 = vshrl.u32 %v406, 7
    %v408 = vsub.s32 %v405, %v407
    %v409 = vrot.slane %v401, %v408
    %v411 = vunpack.c.l.s4 1966171168
    %v412 = vunpack.c.0.s8 %v411
    %v413 = vlaneseq
    %v414 = vshrl.u32 %v413, 7
    %v415 = vsub.s32 %v412, %v414
    %v416 = vrot.slane %v402, %v415
    %v417 = vcombine.low %v409, %v416
    %v418 = vcombine.low %v255, %v279
    %v419 = vcombine.low %v293, %v301
    %v420 = vcombine.low %v303, %v286
    %v421 = vcombine.low %v300, %v302
    %v423 = vunpack.c.l.s4 1966171168
    %v424 = vunpack.c.0.s8 %v423
    %v425 = vlaneseq
    %v426 = vshrl.u32 %v425, 7
    %v427 = vsub.s32 %v424, %v426
    %v428 = vrot.slane %v418, %v427
    %v430 = vunpack.c.l.s4 1966171168
    %v431 = vunpack.c.0.s8 %v430
    %v432 = vlaneseq
    %v433 = vshrl.u32 %v432, 7
    %v434 = vsub.s32 %v431, %v433
    %v435 = vrot.slane %v419, %v434
    %v437 = vunpack.c.l.s4 1966171168
    %v438 = vunpack.c.0.s8 %v437
    %v439 = vlaneseq
    %v440 = vshrl.u32 %v439, 7
    %v441 = vsub.s32 %v438, %v440
    %v442 = vrot.slane %v420, %v441
    %v444 = vunpack.c.l.s4 1966171168
    %v445 = vunpack.c.0.s8 %v444
    %v446 = vlaneseq
    %v447 = vshrl.u32 %v446, 7
    %v448 = vsub.s32 %v445, %v447
    %v449 = vrot.slane %v421, %v448
    %v450 = vcombine.low %v428, %v435
    %v451 = vcombine.low %v442, %v449
    %v453 = vunpack.c.l.s4 1966171168
    %v454 = vunpack.c.0.s8 %v453
    %v455 = vlaneseq
    %v456 = vshrl.u32 %v455, 7
    %v457 = vsub.s32 %v454, %v456
    %v458 = vrot.slane %v450, %v457
    %v460 = vunpack.c.l.s4 1966171168
    %v461 = vunpack.c.0.s8 %v460
    %v462 = vlaneseq
    %v463 = vshrl.u32 %v462, 7
    %v464 = vsub.s32 %v461, %v463
    %v465 = vrot.slane %v451, %v464
    %v466 = vcombine.low %v458, %v465
    %v467 = vcombine.low %v304, %v318
    %v469 = vunpack.c.l.s4 1966171168
    %v470 = vunpack.c.0.s8 %v469
    %v471 = vlaneseq
    %v472 = vshrl.u32 %v471, 7
    %v473 = vsub.s32 %v470, %v472
    %v474 = vrot.slane %v467, %v473
    %v476 = vunpack.c.l.s4 1966171168
    %v477 = vunpack.c.0.s8 %v476
    %v478 = vlaneseq
    %v479 = vshrl.u32 %v478, 7
    %v480 = vsub.s32 %v477, %v479
    %v481 = vrot.slane %v474, %v480
    %v482 = vcombine.low %v343, %v357
    %v483 = vcombine.low %v365, %v367
    %v484 = vcombine.low %v350, %v364
    %v485 = vcombine.low %v366, %v368
    %v487 = vunpack.c.l.s4 1966171168
    %v488 = vunpack.c.0.s8 %v487
    %v489 = vlaneseq
    %v490 = vshrl.u32 %v489, 7
    %v491 = vsub.s32 %v488, %v490
    %v492 = vrot.slane %v482, %v491
    %v494 = vunpack.c.l.s4 1966171168
    %v495 = vunpack.c.0.s8 %v494
    %v496 = vlaneseq
    %v497 = vshrl.u32 %v496, 7
    %v498 = vsub.s32 %v495, %v497
    %v499 = vrot.slane %v483, %v498
    %v501 = vunpack.c.l.s4 1966171168
    %v502 = vunpack.c.0.s8 %v501
    %v503 = vlaneseq
    %v504 = vshrl.u32 %v503, 7
    %v505 = vsub.s32 %v502, %v504
    %v506 = vrot.slane %v484, %v505
    %v508 = vunpack.c.l.s4 1966171168
    %v509 = vunpack.c.0.s8 %v508
    %v510 = vlaneseq
    %v511 = vshrl.u32 %v510, 7
    %v512 = vsub.s32 %v509, %v511
    %v513 = vrot.slane %v485, %v512
    %v514 = vcombine.low %v492, %v499
    %v515 = vcombine.low %v506, %v513
    %v517 = vunpack.c.l.s4 1966171168
    %v518 = vunpack.c.0.s8 %v517
    %v519 = vlaneseq
    %v520 = vshrl.u32 %v519, 7
    %v521 = vsub.s32 %v518, %v520
    %v522 = vrot.slane %v514, %v521
    %v524 = vunpack.c.l.s4 1966171168
    %v525 = vunpack.c.0.s8 %v524
    %v526 = vlaneseq
    %v527 = vshrl.u32 %v526, 7
    %v528 = vsub.s32 %v525, %v527
    %v529 = vrot.slane %v515, %v528
    %v530 = vcombine.low %v522, %v529
    %v531 = vcombine.low %v343, %v343
    %v532 = vcombine.low %v357, %v365
    %v533 = vcombine.low %v367, %v350
    %v534 = vcombine.low %v364, %v366
    %v536 = vunpack.c.l.s4 1966171168
    %v537 = vunpack.c.0.s8 %v536
    %v538 = vlaneseq
    %v539 = vshrl.u32 %v538, 7
    %v540 = vsub.s32 %v537, %v539
    %v541 = vrot.slane %v531, %v540
    %v543 = vunpack.c.l.s4 1966171168
    %v544 = vunpack.c.0.s8 %v543
    %v545 = vlaneseq
    %v546 = vshrl.u32 %v545, 7
    %v547 = vsub.s32 %v544, %v546
    %v548 = vrot.slane %v532, %v547
    %v550 = vunpack.c.l.s4 1966171168
    %v551 = vunpack.c.0.s8 %v550
    %v552 = vlaneseq
    %v553 = vshrl.u32 %v552, 7
    %v554 = vsub.s32 %v551, %v553
    %v555 = vrot.slane %v533, %v554
    %v557 = vunpack.c.l.s4 1966171168
    %v558 = vunpack.c.0.s8 %v557
    %v559 = vlaneseq
    %v560 = vshrl.u32 %v559, 7
    %v561 = vsub.s32 %v558, %v560
    %v562 = vrot.slane %v534, %v561
    %v563 = vcombine.low %v541, %v548
    %v564 = vcombine.low %v555, %v562
    %v566 = vunpack.c.l.s4 1966171168
    %v567 = vunpack.c.0.s8 %v566
    %v568 = vlaneseq
    %v569 = vshrl.u32 %v568, 7
    %v570 = vsub.s32 %v567, %v569
    %v571 = vrot.slane %v563, %v570
    %v573 = vunpack.c.l.s4 1966171168
    %v574 = vunpack.c.0.s8 %v573
    %v575 = vlaneseq
    %v576 = vshrl.u32 %v575, 7
    %v577 = vsub.s32 %v574, %v576
    %v578 = vrot.slane %v564, %v577
    %v579 = vcombine.low %v571, %v578
    %v580 = vcombine.low %v368, %v343
    %v582 = vunpack.c.l.s4 1966171168
    %v583 = vunpack.c.0.s8 %v582
    %v584 = vlaneseq
    %v585 = vshrl.u32 %v584, 7
    %v586 = vsub.s32 %v583, %v585
    %v587 = vrot.slane %v580, %v586
    %v589 = vunpack.c.l.s4 1966171168
    %v590 = vunpack.c.0.s8 %v589
    %v591 = vlaneseq
    %v592 = vshrl.u32 %v591, 7
    %v593 = vsub.s32 %v590, %v592
    %v594 = vrot.slane %v587, %v593
    %vm598 = vcmask 261120
    %v599 = vsel %vm598, %v417, 0
    %v601 = vsel %vm598, %v466, 0
    %v603 = vsel %vm598, %v481, 0
    %605 = vmatprep.subr.mxu0 0.0
    %606 = vmatpush1.msra.mxu0 0.0
    %607 = vmatprep.subr.mxu0 0.0
    %608 = vmatpush1.msra.mxu0 0.0
    %609 = vmatprep.subr.mxu0 0.0
    %610 = vmatpush1.msra.mxu0 0.0
    %611 = vmatprep.subr.mxu0 0.0
    %612 = vmatpush1.msra.mxu0 0.0
    %613 = vmatprep.subr.mxu0 0.0
    %614 = vmatpush1.msra.mxu0 0.0
    %615 = vmatprep.subr.mxu0 0.0
    %616 = vmatpush1.msra.mxu0 0.0
    %617 = vmatprep.subr.mxu0 0.0
    %618 = vmatpush1.msra.mxu0 0.0
    %619 = vmatprep.subr.mxu0 0.0
    %620 = vmatpush1.msra.mxu0 0.0
    %621 = vmatprep.subr.mxu0 0.0
    %622 = vmatpush1.msra.mxu0 0.0
    %623 = vmatprep.subr.mxu0 0.0
    %624 = vmatpush1.msra.mxu0 0.0
    %625 = vmatprep.subr.mxu0 0.0
    %626 = vmatpush1.msra.mxu0 0.0
    %627 = vmatprep.subr.mxu0 0.0
    %628 = vmatpush1.msra.mxu0 0.0
    %629 = vmatprep.subr.mxu0 0.0
    %630 = vmatpush1.msra.mxu0 %v183
    %631 = vmatprep.subr.mxu0 0.0
    %632 = vmatpush1.msra.mxu0 %v182
    %633 = vmatprep.subr.mxu0 0.0
    %634 = vmatpush1.msra.mxu0 %v181
    %635 = vmatprep.subr.mxu0 0.0
    %636 = vmatpush1.msra.mxu0 %v180
    %637 = vmatprep.subr.mxu0 0.0
    %638 = vmatpush2.msra.mxu0 0.0
    %639 = vmatprep.subr.mxu0 0.0
    %640 = vmatpush2.msra.mxu0 0.0
    %641 = vmatprep.subr.mxu0 0.0
    %642 = vmatpush2.msra.mxu0 0.0
    %643 = vmatprep.subr.mxu0 0.0
    %644 = vmatpush2.msra.mxu0 0.0
    %645 = vmatprep.subr.mxu0 0.0
    %646 = vmatpush2.msra.mxu0 0.0
    %647 = vmatprep.subr.mxu0 0.0
    %648 = vmatpush2.msra.mxu0 0.0
    %649 = vmatprep.subr.mxu0 0.0
    %650 = vmatpush2.msra.mxu0 0.0
    %651 = vmatprep.subr.mxu0 0.0
    %652 = vmatpush2.msra.mxu0 0.0
    %653 = vmatprep.subr.mxu0 0.0
    %654 = vmatpush2.msra.mxu0 0.0
    %655 = vmatprep.subr.mxu0 0.0
    %656 = vmatpush2.msra.mxu0 0.0
    %657 = vmatprep.subr.mxu0 0.0
    %658 = vmatpush2.msra.mxu0 0.0
    %659 = vmatprep.subr.mxu0 0.0
    %660 = vmatpush2.msra.mxu0 0.0
    %661 = vmatprep.subr.mxu0 0.0
    %662 = vmatpush2.msra.mxu0 0.0
    %663 = vmatprep.subr.mxu0 0.0
    %664 = vmatpush2.msra.mxu0 0.0
    %665 = vmatprep.subr.mxu0 0.0
    %666 = vmatpush2.msra.mxu0 0.0
    %667 = vmatprep.subr.mxu0 0.0
    %668 = vmatpush2.msra.mxu0 0.0
    %669 = vmatprep.mubr.f32.mxu0 0.0
    %670 = vmatmul.mubr.f32.gmra.mxu0 %v599
    %v671 = vpop.f32.mrf.mxu0
    %v672 = vadd.f32 %v530, %v671
    %v673 = vpop.f32.mrf.mxu0
    %674 = vmatprep.mubr.f32.mxu0 0.0
    %675 = vmatmul.mubr.f32.gmra.mxu0 %v601
    %v676 = vpop.f32.mrf.mxu0
    %v677 = vadd.f32 %v579, %v676
    %v678 = vpop.f32.mrf.mxu0
    %679 = vmatprep.mubr.f32.mxu0 0.0
    %680 = vmatmul.mubr.f32.gmra.mxu0 %v603
    %v681 = vpop.f32.mrf.mxu0
    %v682 = vadd.f32 %v594, %v681
    %v683 = vpop.f32.mrf.mxu0
    %684 = vdwg.mxu0
    %v688 = vcombine.high %v672, %v672
    %v690 = vunpack.c.l.s4 1966171168
    %v691 = vunpack.c.0.s8 %v690
    %v692 = vlaneseq
    %v693 = vshrl.u32 %v692, 7
    %v694 = vsub.s32 %v691, %v693
    %v695 = vrot.slane %v672, %v694
    %v697 = vunpack.c.l.s4 1966171168
    %v698 = vunpack.c.0.s8 %v697
    %v699 = vlaneseq
    %v700 = vshrl.u32 %v699, 7
    %v701 = vsub.s32 %v698, %v700
    %v702 = vrot.slane %v688, %v701
    %v703 = vcombine.high %v695, %v695
    %v704 = vcombine.high %v702, %v702
    %v706 = vunpack.c.l.s4 1966171168
    %v707 = vunpack.c.0.s8 %v706
    %v708 = vlaneseq
    %v709 = vshrl.u32 %v708, 7
    %v710 = vsub.s32 %v707, %v709
    %v711 = vrot.slane %v695, %v710
    %v713 = vunpack.c.l.s4 1966171168
    %v714 = vunpack.c.0.s8 %v713
    %v715 = vlaneseq
    %v716 = vshrl.u32 %v715, 7
    %v717 = vsub.s32 %v714, %v716
    %v718 = vrot.slane %v702, %v717
    %v720 = vunpack.c.l.s4 1966171168
    %v721 = vunpack.c.0.s8 %v720
    %v722 = vlaneseq
    %v723 = vshrl.u32 %v722, 7
    %v724 = vsub.s32 %v721, %v723
    %v725 = vrot.slane %v703, %v724
    %v727 = vunpack.c.l.s4 1966171168
    %v728 = vunpack.c.0.s8 %v727
    %v729 = vlaneseq
    %v730 = vshrl.u32 %v729, 7
    %v731 = vsub.s32 %v728, %v730
    %v732 = vrot.slane %v704, %v731
    %v733 = vcombine.high %v711, %v711
    %v734 = vcombine.high %v718, %v718
    %v735 = vcombine.high %v725, %v725
    %v736 = vcombine.high %v732, %v732
    %v737 = vcombine.high %v677, %v677
    %v739 = vunpack.c.l.s4 1966171168
    %v740 = vunpack.c.0.s8 %v739
    %v741 = vlaneseq
    %v742 = vshrl.u32 %v741, 7
    %v743 = vsub.s32 %v740, %v742
    %v744 = vrot.slane %v677, %v743
    %v746 = vunpack.c.l.s4 1966171168
    %v747 = vunpack.c.0.s8 %v746
    %v748 = vlaneseq
    %v749 = vshrl.u32 %v748, 7
    %v750 = vsub.s32 %v747, %v749
    %v751 = vrot.slane %v737, %v750
    %v752 = vcombine.high %v744, %v744
    %v753 = vcombine.high %v751, %v751
    %v755 = vunpack.c.l.s4 1966171168
    %v756 = vunpack.c.0.s8 %v755
    %v757 = vlaneseq
    %v758 = vshrl.u32 %v757, 7
    %v759 = vsub.s32 %v756, %v758
    %v760 = vrot.slane %v744, %v759
    %v762 = vunpack.c.l.s4 1966171168
    %v763 = vunpack.c.0.s8 %v762
    %v764 = vlaneseq
    %v765 = vshrl.u32 %v764, 7
    %v766 = vsub.s32 %v763, %v765
    %v767 = vrot.slane %v751, %v766
    %v769 = vunpack.c.l.s4 1966171168
    %v770 = vunpack.c.0.s8 %v769
    %v771 = vlaneseq
    %v772 = vshrl.u32 %v771, 7
    %v773 = vsub.s32 %v770, %v772
    %v774 = vrot.slane %v752, %v773
    %v776 = vunpack.c.l.s4 1966171168
    %v777 = vunpack.c.0.s8 %v776
    %v778 = vlaneseq
    %v779 = vshrl.u32 %v778, 7
    %v780 = vsub.s32 %v777, %v779
    %v781 = vrot.slane %v753, %v780
    %v782 = vcombine.high %v760, %v760
    %v783 = vcombine.high %v767, %v767
    %v784 = vcombine.high %v774, %v774
    %v785 = vcombine.high %v781, %v781
    %v787 = vunpack.c.l.s4 1966171168
    %v788 = vunpack.c.0.s8 %v787
    %v789 = vlaneseq
    %v790 = vshrl.u32 %v789, 7
    %v791 = vsub.s32 %v788, %v790
    %v792 = vrot.slane %v682, %v791
    %v793 = vcombine.high %v792, %v792
    %v795 = vunpack.c.l.s4 1966171168
    %v796 = vunpack.c.0.s8 %v795
    %v797 = vlaneseq
    %v798 = vshrl.u32 %v797, 7
    %v799 = vsub.s32 %v796, %v798
    %v800 = vrot.slane %v792, %v799
    %v802 = vunpack.c.l.s4 1966171168
    %v803 = vunpack.c.0.s8 %v802
    %v804 = vlaneseq
    %v805 = vshrl.u32 %v804, 7
    %v806 = vsub.s32 %v803, %v805
    %v807 = vrot.slane %v793, %v806
    %v826 = vld [vmem:[%s2 + $0x6] sm:$0x1]
    %v827 = vld [vmem:[%s2 + $0x7] sm:$0x1]
    %v828 = vcombine.low %v711, %v725
    %v829 = vcombine.low %v733, %v735
    %v830 = vcombine.low %v718, %v732
    %v831 = vcombine.low %v734, %v736
    %v833 = vunpack.c.l.s4 1966171168
    %v834 = vunpack.c.0.s8 %v833
    %v835 = vlaneseq
    %v836 = vshrl.u32 %v835, 7
    %v837 = vsub.s32 %v834, %v836
    %v838 = vrot.slane %v828, %v837
    %v840 = vunpack.c.l.s4 1966171168
    %v841 = vunpack.c.0.s8 %v840
    %v842 = vlaneseq
    %v843 = vshrl.u32 %v842, 7
    %v844 = vsub.s32 %v841, %v843
    %v845 = vrot.slane %v829, %v844
    %v847 = vunpack.c.l.s4 1966171168
    %v848 = vunpack.c.0.s8 %v847
    %v849 = vlaneseq
    %v850 = vshrl.u32 %v849, 7
    %v851 = vsub.s32 %v848, %v850
    %v852 = vrot.slane %v830, %v851
    %v854 = vunpack.c.l.s4 1966171168
    %v855 = vunpack.c.0.s8 %v854
    %v856 = vlaneseq
    %v857 = vshrl.u32 %v856, 7
    %v858 = vsub.s32 %v855, %v857
    %v859 = vrot.slane %v831, %v858
    %v860 = vcombine.low %v838, %v845
    %v861 = vcombine.low %v852, %v859
    %v863 = vunpack.c.l.s4 1966171168
    %v864 = vunpack.c.0.s8 %v863
    %v865 = vlaneseq
    %v866 = vshrl.u32 %v865, 7
    %v867 = vsub.s32 %v864, %v866
    %v868 = vrot.slane %v860, %v867
    %v870 = vunpack.c.l.s4 1966171168
    %v871 = vunpack.c.0.s8 %v870
    %v872 = vlaneseq
    %v873 = vshrl.u32 %v872, 7
    %v874 = vsub.s32 %v871, %v873
    %v875 = vrot.slane %v861, %v874
    %v876 = vcombine.low %v868, %v875
    %v878 = vunpack.c.l.s4 1966171168
    %v879 = vunpack.c.0.s8 %v878
    %v880 = vlaneseq
    %v881 = vshrl.u32 %v880, 7
    %v882 = vsub.s32 %v879, %v881
    %v883 = vrot.slane %v760, %v882
    %v885 = vunpack.c.l.s4 1966171168
    %v886 = vunpack.c.0.s8 %v885
    %v887 = vlaneseq
    %v888 = vshrl.u32 %v887, 7
    %v889 = vsub.s32 %v886, %v888
    %v890 = vrot.slane %v883, %v889
    %v891 = vcombine.low %v774, %v782
    %v892 = vcombine.low %v784, %v767
    %v893 = vcombine.low %v781, %v783
    %v894 = vcombine.low %v785, %v800
    %v896 = vunpack.c.l.s4 1966171168
    %v897 = vunpack.c.0.s8 %v896
    %v898 = vlaneseq
    %v899 = vshrl.u32 %v898, 7
    %v900 = vsub.s32 %v897, %v899
    %v901 = vrot.slane %v891, %v900
    %v903 = vunpack.c.l.s4 1966171168
    %v904 = vunpack.c.0.s8 %v903
    %v905 = vlaneseq
    %v906 = vshrl.u32 %v905, 7
    %v907 = vsub.s32 %v904, %v906
    %v908 = vrot.slane %v892, %v907
    %v910 = vunpack.c.l.s4 1966171168
    %v911 = vunpack.c.0.s8 %v910
    %v912 = vlaneseq
    %v913 = vshrl.u32 %v912, 7
    %v914 = vsub.s32 %v911, %v913
    %v915 = vrot.slane %v893, %v914
    %v917 = vunpack.c.l.s4 1966171168
    %v918 = vunpack.c.0.s8 %v917
    %v919 = vlaneseq
    %v920 = vshrl.u32 %v919, 7
    %v921 = vsub.s32 %v918, %v920
    %v922 = vrot.slane %v894, %v921
    %v923 = vcombine.low %v901, %v908
    %v924 = vcombine.low %v915, %v922
    %v926 = vunpack.c.l.s4 1966171168
    %v927 = vunpack.c.0.s8 %v926
    %v928 = vlaneseq
    %v929 = vshrl.u32 %v928, 7
    %v930 = vsub.s32 %v927, %v929
    %v931 = vrot.slane %v923, %v930
    %v933 = vunpack.c.l.s4 1966171168
    %v934 = vunpack.c.0.s8 %v933
    %v935 = vlaneseq
    %v936 = vshrl.u32 %v935, 7
    %v937 = vsub.s32 %v934, %v936
    %v938 = vrot.slane %v924, %v937
    %v939 = vcombine.low %v931, %v938
    %v941 = vunpack.c.l.s4 1966171168
    %v942 = vunpack.c.0.s8 %v941
    %v943 = vlaneseq
    %v944 = vshrl.u32 %v943, 7
    %v945 = vsub.s32 %v942, %v944
    %v946 = vrot.slane %v807, %v945
    %v948 = vunpack.c.l.s4 1966171168
    %v949 = vunpack.c.0.s8 %v948
    %v950 = vlaneseq
    %v951 = vshrl.u32 %v950, 7
    %v952 = vsub.s32 %v949, %v951
    %v953 = vrot.slane %v946, %v952
    %v958 = vsel %vm598, %v876, 0.0
    %vm959 = vcmask 253952
    %v960 = vsel %vm959, %v890, 0.0
    %v961 = vadd.f32 %v958, %v960
    %v962 = vsel %vm598, %v939, 0.0
    %v963 = vadd.f32 %v961, %v962
    %v964 = vsel %vm959, %v953, 0.0
    %v965 = vadd.f32 %v963, %v964
    %v966 = vrot.slane %v965, 4
    %v967 = vadd.f32 %v965, %v966
    %v968 = vrot.slane %v967, 2
    %v969 = vadd.f32 %v967, %v968
    %v970 = vrot.slane %v969, 1
    %v971 = vadd.f32 %v969, %v970
    %v972 = vrcp.pop 18.0
    %v973 = vmul.f32 %v971, %v972
    %v974 = vmul.f32 %v711, %v711
    %v975 = vmul.f32 %v725, %v725
    %v976 = vmul.f32 %v733, %v733
    %v977 = vmul.f32 %v735, %v735
    %v978 = vmul.f32 %v718, %v718
    %v979 = vmul.f32 %v732, %v732
    %v980 = vmul.f32 %v734, %v734
    %v981 = vmul.f32 %v736, %v736
    %v982 = vmul.f32 %v760, %v760
    %v983 = vmul.f32 %v774, %v774
    %v984 = vmul.f32 %v782, %v782
    %v985 = vmul.f32 %v784, %v784
    %v986 = vmul.f32 %v767, %v767
    %v987 = vmul.f32 %v781, %v781
    %v988 = vmul.f32 %v783, %v783
    %v989 = vmul.f32 %v785, %v785
    %v990 = vmul.f32 %v800, %v800
    %v991 = vmul.f32 %v807, %v807
    %v1010 = vcombine.low %v974, %v975
    %v1011 = vcombine.low %v976, %v977
    %v1012 = vcombine.low %v978, %v979
    %v1013 = vcombine.low %v980, %v981
    %v1015 = vunpack.c.l.s4 1966171168
    %v1016 = vunpack.c.0.s8 %v1015
    %v1017 = vlaneseq
    %v1018 = vshrl.u32 %v1017, 7
    %v1019 = vsub.s32 %v1016, %v1018
    %v1020 = vrot.slane %v1010, %v1019
    %v1022 = vunpack.c.l.s4 1966171168
    %v1023 = vunpack.c.0.s8 %v1022
    %v1024 = vlaneseq
    %v1025 = vshrl.u32 %v1024, 7
    %v1026 = vsub.s32 %v1023, %v1025
    %v1027 = vrot.slane %v1011, %v1026
    %v1029 = vunpack.c.l.s4 1966171168
    %v1030 = vunpack.c.0.s8 %v1029
    %v1031 = vlaneseq
    %v1032 = vshrl.u32 %v1031, 7
    %v1033 = vsub.s32 %v1030, %v1032
    %v1034 = vrot.slane %v1012, %v1033
    %v1036 = vunpack.c.l.s4 1966171168
    %v1037 = vunpack.c.0.s8 %v1036
    %v1038 = vlaneseq
    %v1039 = vshrl.u32 %v1038, 7
    %v1040 = vsub.s32 %v1037, %v1039
    %v1041 = vrot.slane %v1013, %v1040
    %v1042 = vcombine.low %v1020, %v1027
    %v1043 = vcombine.low %v1034, %v1041
    %v1045 = vunpack.c.l.s4 1966171168
    %v1046 = vunpack.c.0.s8 %v1045
    %v1047 = vlaneseq
    %v1048 = vshrl.u32 %v1047, 7
    %v1049 = vsub.s32 %v1046, %v1048
    %v1050 = vrot.slane %v1042, %v1049
    %v1052 = vunpack.c.l.s4 1966171168
    %v1053 = vunpack.c.0.s8 %v1052
    %v1054 = vlaneseq
    %v1055 = vshrl.u32 %v1054, 7
    %v1056 = vsub.s32 %v1053, %v1055
    %v1057 = vrot.slane %v1043, %v1056
    %v1058 = vcombine.low %v1050, %v1057
    %v1060 = vunpack.c.l.s4 1966171168
    %v1061 = vunpack.c.0.s8 %v1060
    %v1062 = vlaneseq
    %v1063 = vshrl.u32 %v1062, 7
    %v1064 = vsub.s32 %v1061, %v1063
    %v1065 = vrot.slane %v982, %v1064
    %v1067 = vunpack.c.l.s4 1966171168
    %v1068 = vunpack.c.0.s8 %v1067
    %v1069 = vlaneseq
    %v1070 = vshrl.u32 %v1069, 7
    %v1071 = vsub.s32 %v1068, %v1070
    %v1072 = vrot.slane %v1065, %v1071
    %v1073 = vcombine.low %v983, %v984
    %v1074 = vcombine.low %v985, %v986
    %v1075 = vcombine.low %v987, %v988
    %v1076 = vcombine.low %v989, %v990
    %v1078 = vunpack.c.l.s4 1966171168
    %v1079 = vunpack.c.0.s8 %v1078
    %v1080 = vlaneseq
    %v1081 = vshrl.u32 %v1080, 7
    %v1082 = vsub.s32 %v1079, %v1081
    %v1083 = vrot.slane %v1073, %v1082
    %v1085 = vunpack.c.l.s4 1966171168
    %v1086 = vunpack.c.0.s8 %v1085
    %v1087 = vlaneseq
    %v1088 = vshrl.u32 %v1087, 7
    %v1089 = vsub.s32 %v1086, %v1088
    %v1090 = vrot.slane %v1074, %v1089
    %v1092 = vunpack.c.l.s4 1966171168
    %v1093 = vunpack.c.0.s8 %v1092
    %v1094 = vlaneseq
    %v1095 = vshrl.u32 %v1094, 7
    %v1096 = vsub.s32 %v1093, %v1095
    %v1097 = vrot.slane %v1075, %v1096
    %v1099 = vunpack.c.l.s4 1966171168
    %v1100 = vunpack.c.0.s8 %v1099
    %v1101 = vlaneseq
    %v1102 = vshrl.u32 %v1101, 7
    %v1103 = vsub.s32 %v1100, %v1102
    %v1104 = vrot.slane %v1076, %v1103
    %v1105 = vcombine.low %v1083, %v1090
    %v1106 = vcombine.low %v1097, %v1104
    %v1108 = vunpack.c.l.s4 1966171168
    %v1109 = vunpack.c.0.s8 %v1108
    %v1110 = vlaneseq
    %v1111 = vshrl.u32 %v1110, 7
    %v1112 = vsub.s32 %v1109, %v1111
    %v1113 = vrot.slane %v1105, %v1112
    %v1115 = vunpack.c.l.s4 1966171168
    %v1116 = vunpack.c.0.s8 %v1115
    %v1117 = vlaneseq
    %v1118 = vshrl.u32 %v1117, 7
    %v1119 = vsub.s32 %v1116, %v1118
    %v1120 = vrot.slane %v1106, %v1119
    %v1121 = vcombine.low %v1113, %v1120
    %v1123 = vunpack.c.l.s4 1966171168
    %v1124 = vunpack.c.0.s8 %v1123
    %v1125 = vlaneseq
    %v1126 = vshrl.u32 %v1125, 7
    %v1127 = vsub.s32 %v1124, %v1126
    %v1128 = vrot.slane %v991, %v1127
    %v1130 = vunpack.c.l.s4 1966171168
    %v1131 = vunpack.c.0.s8 %v1130
    %v1132 = vlaneseq
    %v1133 = vshrl.u32 %v1132, 7
    %v1134 = vsub.s32 %v1131, %v1133
    %v1135 = vrot.slane %v1128, %v1134
    %v1140 = vsel %vm598, %v1058, 0.0
    %v1141 = vsel %vm959, %v1072, 0.0
    %v1142 = vadd.f32 %v1140, %v1141
    %v1143 = vsel %vm598, %v1121, 0.0
    %v1144 = vadd.f32 %v1142, %v1143
    %v1145 = vsel %vm959, %v1135, 0.0
    %v1146 = vadd.f32 %v1144, %v1145
    %v1147 = vrot.slane %v1146, 4
    %v1148 = vadd.f32 %v1146, %v1147
    %v1149 = vrot.slane %v1148, 2
    %v1150 = vadd.f32 %v1148, %v1149
    %v1151 = vrot.slane %v1150, 1
    %v1152 = vadd.f32 %v1150, %v1151
    %v1153 = vmul.f32 %v1152, %v972
    %v1154 = vmul.f32 %v973, %v973
    %v1155 = vsub.f32 %v1153, %v1154
    %v1157 = vcombine.high %v973, %v973
    %v1159 = vunpack.c.l.s4 1966171168
    %v1160 = vunpack.c.0.s8 %v1159
    %v1161 = vlaneseq
    %v1162 = vshrl.u32 %v1161, 7
    %v1163 = vsub.s32 %v1160, %v1162
    %v1164 = vrot.slane %v973, %v1163
    %v1166 = vunpack.c.l.s4 1966171168
    %v1167 = vunpack.c.0.s8 %v1166
    %v1168 = vlaneseq
    %v1169 = vshrl.u32 %v1168, 7
    %v1170 = vsub.s32 %v1167, %v1169
    %v1171 = vrot.slane %v1157, %v1170
    %v1172 = vcombine.high %v1164, %v1164
    %v1173 = vcombine.high %v1171, %v1171
    %v1175 = vunpack.c.l.s4 1966171168
    %v1176 = vunpack.c.0.s8 %v1175
    %v1177 = vlaneseq
    %v1178 = vshrl.u32 %v1177, 7
    %v1179 = vsub.s32 %v1176, %v1178
    %v1180 = vrot.slane %v1164, %v1179
    %v1182 = vunpack.c.l.s4 1966171168
    %v1183 = vunpack.c.0.s8 %v1182
    %v1184 = vlaneseq
    %v1185 = vshrl.u32 %v1184, 7
    %v1186 = vsub.s32 %v1183, %v1185
    %v1187 = vrot.slane %v1171, %v1186
    %v1189 = vunpack.c.l.s4 1966171168
    %v1190 = vunpack.c.0.s8 %v1189
    %v1191 = vlaneseq
    %v1192 = vshrl.u32 %v1191, 7
    %v1193 = vsub.s32 %v1190, %v1192
    %v1194 = vrot.slane %v1172, %v1193
    %v1196 = vunpack.c.l.s4 1966171168
    %v1197 = vunpack.c.0.s8 %v1196
    %v1198 = vlaneseq
    %v1199 = vshrl.u32 %v1198, 7
    %v1200 = vsub.s32 %v1197, %v1199
    %v1201 = vrot.slane %v1173, %v1200
    %v1202 = vcombine.high %v1180, %v1180
    %v1203 = vcombine.high %v1187, %v1187
    %v1204 = vcombine.high %v1194, %v1194
    %v1205 = vcombine.high %v1201, %v1201
    %v1214 = vsub.f32 %v711, %v1180
    %v1215 = vsub.f32 %v725, %v1194
    %v1216 = vsub.f32 %v733, %v1202
    %v1217 = vsub.f32 %v735, %v1204
    %v1218 = vsub.f32 %v718, %v1187
    %v1219 = vsub.f32 %v732, %v1201
    %v1220 = vsub.f32 %v734, %v1203
    %v1221 = vsub.f32 %v736, %v1205
    %v1222 = vsub.f32 %v760, %v1180
    %v1223 = vsub.f32 %v774, %v1180
    %v1224 = vsub.f32 %v782, %v1194
    %v1225 = vsub.f32 %v784, %v1202
    %v1226 = vsub.f32 %v767, %v1204
    %v1227 = vsub.f32 %v781, %v1187
    %v1228 = vsub.f32 %v783, %v1201
    %v1229 = vsub.f32 %v785, %v1203
    %v1230 = vsub.f32 %v800, %v1205
    %v1231 = vsub.f32 %v807, %v1180
    %v1232 = vlaneseq
    %v1233 = vshrl.u32 %v1232, 7
    %v1234 = vsub.s32 0, %v1233
    %v1235 = vrot.slane %v826, %v1234
    %v1254 = vcombine.low %v1214, %v1215
    %v1255 = vcombine.low %v1216, %v1217
    %v1256 = vcombine.low %v1218, %v1219
    %v1257 = vcombine.low %v1220, %v1221
    %v1259 = vunpack.c.l.s4 1966171168
    %v1260 = vunpack.c.0.s8 %v1259
    %v1261 = vlaneseq
    %v1262 = vshrl.u32 %v1261, 7
    %v1263 = vsub.s32 %v1260, %v1262
    %v1264 = vrot.slane %v1254, %v1263
    %v1266 = vunpack.c.l.s4 1966171168
    %v1267 = vunpack.c.0.s8 %v1266
    %v1268 = vlaneseq
    %v1269 = vshrl.u32 %v1268, 7
    %v1270 = vsub.s32 %v1267, %v1269
    %v1271 = vrot.slane %v1255, %v1270
    %v1273 = vunpack.c.l.s4 1966171168
    %v1274 = vunpack.c.0.s8 %v1273
    %v1275 = vlaneseq
    %v1276 = vshrl.u32 %v1275, 7
    %v1277 = vsub.s32 %v1274, %v1276
    %v1278 = vrot.slane %v1256, %v1277
    %v1280 = vunpack.c.l.s4 1966171168
    %v1281 = vunpack.c.0.s8 %v1280
    %v1282 = vlaneseq
    %v1283 = vshrl.u32 %v1282, 7
    %v1284 = vsub.s32 %v1281, %v1283
    %v1285 = vrot.slane %v1257, %v1284
    %v1286 = vcombine.low %v1264, %v1271
    %v1287 = vcombine.low %v1278, %v1285
    %v1289 = vunpack.c.l.s4 1966171168
    %v1290 = vunpack.c.0.s8 %v1289
    %v1291 = vlaneseq
    %v1292 = vshrl.u32 %v1291, 7
    %v1293 = vsub.s32 %v1290, %v1292
    %v1294 = vrot.slane %v1286, %v1293
    %v1296 = vunpack.c.l.s4 1966171168
    %v1297 = vunpack.c.0.s8 %v1296
    %v1298 = vlaneseq
    %v1299 = vshrl.u32 %v1298, 7
    %v1300 = vsub.s32 %v1297, %v1299
    %v1301 = vrot.slane %v1287, %v1300
    %v1302 = vcombine.low %v1294, %v1301
    %v1304 = vunpack.c.l.s4 1966171168
    %v1305 = vunpack.c.0.s8 %v1304
    %v1306 = vlaneseq
    %v1307 = vshrl.u32 %v1306, 7
    %v1308 = vsub.s32 %v1305, %v1307
    %v1309 = vrot.slane %v1222, %v1308
    %v1311 = vunpack.c.l.s4 1966171168
    %v1312 = vunpack.c.0.s8 %v1311
    %v1313 = vlaneseq
    %v1314 = vshrl.u32 %v1313, 7
    %v1315 = vsub.s32 %v1312, %v1314
    %v1316 = vrot.slane %v1309, %v1315
    %v1317 = vcombine.low %v1223, %v1224
    %v1318 = vcombine.low %v1225, %v1226
    %v1319 = vcombine.low %v1227, %v1228
    %v1320 = vcombine.low %v1229, %v1230
    %v1322 = vunpack.c.l.s4 1966171168
    %v1323 = vunpack.c.0.s8 %v1322
    %v1324 = vlaneseq
    %v1325 = vshrl.u32 %v1324, 7
    %v1326 = vsub.s32 %v1323, %v1325
    %v1327 = vrot.slane %v1317, %v1326
    %v1329 = vunpack.c.l.s4 1966171168
    %v1330 = vunpack.c.0.s8 %v1329
    %v1331 = vlaneseq
    %v1332 = vshrl.u32 %v1331, 7
    %v1333 = vsub.s32 %v1330, %v1332
    %v1334 = vrot.slane %v1318, %v1333
    %v1336 = vunpack.c.l.s4 1966171168
    %v1337 = vunpack.c.0.s8 %v1336
    %v1338 = vlaneseq
    %v1339 = vshrl.u32 %v1338, 7
    %v1340 = vsub.s32 %v1337, %v1339
    %v1341 = vrot.slane %v1319, %v1340
    %v1343 = vunpack.c.l.s4 1966171168
    %v1344 = vunpack.c.0.s8 %v1343
    %v1345 = vlaneseq
    %v1346 = vshrl.u32 %v1345, 7
    %v1347 = vsub.s32 %v1344, %v1346
    %v1348 = vrot.slane %v1320, %v1347
    %v1349 = vcombine.low %v1327, %v1334
    %v1350 = vcombine.low %v1341, %v1348
    %v1352 = vunpack.c.l.s4 1966171168
    %v1353 = vunpack.c.0.s8 %v1352
    %v1354 = vlaneseq
    %v1355 = vshrl.u32 %v1354, 7
    %v1356 = vsub.s32 %v1353, %v1355
    %v1357 = vrot.slane %v1349, %v1356
    %v1359 = vunpack.c.l.s4 1966171168
    %v1360 = vunpack.c.0.s8 %v1359
    %v1361 = vlaneseq
    %v1362 = vshrl.u32 %v1361, 7
    %v1363 = vsub.s32 %v1360, %v1362
    %v1364 = vrot.slane %v1350, %v1363
    %v1365 = vcombine.low %v1357, %v1364
    %v1367 = vunpack.c.l.s4 1966171168
    %v1368 = vunpack.c.0.s8 %v1367
    %v1369 = vlaneseq
    %v1370 = vshrl.u32 %v1369, 7
    %v1371 = vsub.s32 %v1368, %v1370
    %v1372 = vrot.slane %v1231, %v1371
    %v1374 = vunpack.c.l.s4 1966171168
    %v1375 = vunpack.c.0.s8 %v1374
    %v1376 = vlaneseq
    %v1377 = vshrl.u32 %v1376, 7
    %v1378 = vsub.s32 %v1375, %v1377
    %v1379 = vrot.slane %v1372, %v1378
    %v1384 = vmul.f32 %v1235, %v1302
    %v1385 = vmul.f32 %v1235, %v1316
    %v1386 = vmul.f32 %v1235, %v1365
    %v1387 = vmul.f32 %v1235, %v1379
    %v1388 = vadd.f32 %v1155, 1e-05
    %v1389 = vrsqrt.pop %v1388
    %v1390 = vmul.f32 %v1384, %v1389
    %v1391 = vmul.f32 %v1385, %v1389
    %v1392 = vmul.f32 %v1386, %v1389
    %v1393 = vmul.f32 %v1387, %v1389
    %v1394 = vlaneseq
    %v1395 = vshrl.u32 %v1394, 7
    %v1396 = vsub.s32 0, %v1395
    %v1397 = vrot.slane %v827, %v1396
    %v1398 = vadd.f32 %v1390, %v1397
    %v1399 = vadd.f32 %v1391, %v1397
    %v1400 = vadd.f32 %v1392, %v1397
    %v1401 = vadd.f32 %v1393, %v1397
    %v1402 = vmax.f32 %v1398, 0.0
    %v1403 = vmax.f32 %v1399, 0.0
    %v1404 = vmax.f32 %v1400, 0.0
    %v1405 = vmax.f32 %v1401, 0.0
    %v1410 = vrot.slane %v1402, 1
    %v1411 = vrot.slane %v1403, 1
    %v1412 = vsel %vm70, %v1410, %v1411
    %v1413 = vrot.slane %v1404, 1
    %v1414 = vrot.slane %v1405, 1
    %v1415 = vsel %vm70, %v1413, %v1414
    %1416 = vrot.lane.b32.xlu0 %v1412, 32
    %v1417 = vpop.permute.xlu0 %1416
    %1418 = vrot.lane.b32.xlu0 %v1415, 32
    %v1419 = vpop.permute.xlu0 %1418
    %v1422 = vsel %vm598, %v1402, %v1417
    %v1423 = vsel %vm598, %v1404, %v1419
    %v1424 = vld [vmem:[%s1 + $0x20] sm:$0xff]
    %v1425 = vld [vmem:[%s1 + $0x28] sm:$0xff]
    %v1426 = vld [vmem:[%s1 + $0x30] sm:$0xff]
    %v1427 = vld [vmem:[%s1 + $0x38] sm:$0xff]
    %v1428 = vld [vmem:[%s1 + $0x40] sm:$0xff]
    %v1429 = vld [vmem:[%s1 + $0x48] sm:$0xff]
    %v1430 = vld [vmem:[%s1 + $0x50] sm:$0xff]
    %v1431 = vld [vmem:[%s1 + $0x58] sm:$0xff]
    %v1432 = vld [vmem:[%s2 + $0x8] sm:$0x1]
    %v1433 = vlaneseq
    %v1434 = vshrl.u32 %v1433, 7
    %v1435 = vsub.s32 0, %v1434
    %v1436 = vrot.slane %v1432, %v1435
    %vm1437 = vcmask 523264
    %v1439 = vsel %vm1437, %v1422, 0
    %v1442 = vsel %vm1437, %v1423, 0
    %1444 = vmatprep.subr.mxu0 0.0
    %1445 = vmatpush1.msra.mxu0 0.0
    %1446 = vmatprep.subr.mxu0 0.0
    %1447 = vmatpush1.msra.mxu0 0.0
    %1448 = vmatprep.subr.mxu0 0.0
    %1449 = vmatpush1.msra.mxu0 0.0
    %1450 = vmatprep.subr.mxu0 0.0
    %1451 = vmatpush1.msra.mxu0 0.0
    %1452 = vmatprep.subr.mxu0 0.0
    %1453 = vmatpush1.msra.mxu0 0.0
    %1454 = vmatprep.subr.mxu0 0.0
    %1455 = vmatpush1.msra.mxu0 0.0
    %1456 = vmatprep.subr.mxu0 0.0
    %1457 = vmatpush1.msra.mxu0 0.0
    %1458 = vmatprep.subr.mxu0 0.0
    %1459 = vmatpush1.msra.mxu0 0.0
    %1460 = vmatprep.subr.mxu0 0.0
    %1461 = vmatpush1.msra.mxu0 %v1431
    %1462 = vmatprep.subr.mxu0 0.0
    %1463 = vmatpush1.msra.mxu0 %v1430
    %1464 = vmatprep.subr.mxu0 0.0
    %1465 = vmatpush1.msra.mxu0 %v1429
    %1466 = vmatprep.subr.mxu0 0.0
    %1467 = vmatpush1.msra.mxu0 %v1428
    %1468 = vmatprep.subr.mxu0 0.0
    %1469 = vmatpush1.msra.mxu0 %v1427
    %1470 = vmatprep.subr.mxu0 0.0
    %1471 = vmatpush1.msra.mxu0 %v1426
    %1472 = vmatprep.subr.mxu0 0.0
    %1473 = vmatpush1.msra.mxu0 %v1425
    %1474 = vmatprep.subr.mxu0 0.0
    %1475 = vmatpush1.msra.mxu0 %v1424
    %1476 = vmatprep.subr.mxu0 0.0
    %1477 = vmatpush2.msra.mxu0 0.0
    %1478 = vmatprep.subr.mxu0 0.0
    %1479 = vmatpush2.msra.mxu0 0.0
    %1480 = vmatprep.subr.mxu0 0.0
    %1481 = vmatpush2.msra.mxu0 0.0
    %1482 = vmatprep.subr.mxu0 0.0
    %1483 = vmatpush2.msra.mxu0 0.0
    %1484 = vmatprep.subr.mxu0 0.0
    %1485 = vmatpush2.msra.mxu0 0.0
    %1486 = vmatprep.subr.mxu0 0.0
    %1487 = vmatpush2.msra.mxu0 0.0
    %1488 = vmatprep.subr.mxu0 0.0
    %1489 = vmatpush2.msra.mxu0 0.0
    %1490 = vmatprep.subr.mxu0 0.0
    %1491 = vmatpush2.msra.mxu0 0.0
    %1492 = vmatprep.subr.mxu0 0.0
    %1493 = vmatpush2.msra.mxu0 0.0
    %1494 = vmatprep.subr.mxu0 0.0
    %1495 = vmatpush2.msra.mxu0 0.0
    %1496 = vmatprep.subr.mxu0 0.0
    %1497 = vmatpush2.msra.mxu0 0.0
    %1498 = vmatprep.subr.mxu0 0.0
    %1499 = vmatpush2.msra.mxu0 0.0
    %1500 = vmatprep.subr.mxu0 0.0
    %1501 = vmatpush2.msra.mxu0 0.0
    %1502 = vmatprep.subr.mxu0 0.0
    %1503 = vmatpush2.msra.mxu0 0.0
    %1504 = vmatprep.subr.mxu0 0.0
    %1505 = vmatpush2.msra.mxu0 0.0
    %1506 = vmatprep.subr.mxu0 0.0
    %1507 = vmatpush2.msra.mxu0 0.0
    %1508 = vmatprep.mubr.f32.mxu0 0.0
    %1509 = vmatmul.mubr.f32.gmra.mxu0 %v1439
    %v1510 = vpop.f32.mrf.mxu0
    %v1511 = vadd.f32 %v1436, %v1510
    %v1512 = vpop.f32.mrf.mxu0
    %1513 = vmatprep.mubr.f32.mxu0 0.0
    %1514 = vmatmul.mubr.f32.gmra.mxu0 %v1442
    %v1515 = vpop.f32.mrf.mxu0
    %v1516 = vadd.f32 %v1436, %v1515
    %v1517 = vpop.f32.mrf.mxu0
    %1518 = vdwg.mxu0
    %v1519 = vld [vmem:[%s2 + $0x9] sm:$0x1]
    %v1520 = vld [vmem:[%s2 + $0xa] sm:$0x1]
    %v1521 = vsel %vm1437, %v1511, 0.0
    %v1522 = vsel %vm1437, %v1516, 0.0
    %v1523 = vadd.f32 %v1521, %v1522
    %v1524 = vrot.slane %v1523, 4
    %v1525 = vadd.f32 %v1523, %v1524
    %v1526 = vrot.slane %v1525, 2
    %v1527 = vadd.f32 %v1525, %v1526
    %v1528 = vrot.slane %v1527, 1
    %v1529 = vadd.f32 %v1527, %v1528
    %v1530 = vrcp.pop 16.0
    %v1531 = vmul.f32 %v1529, %v1530
    %v1532 = vmul.f32 %v1511, %v1511
    %v1533 = vmul.f32 %v1516, %v1516
    %v1534 = vsel %vm1437, %v1532, 0.0
    %v1535 = vsel %vm1437, %v1533, 0.0
    %v1536 = vadd.f32 %v1534, %v1535
    %v1537 = vrot.slane %v1536, 4
    %v1538 = vadd.f32 %v1536, %v1537
    %v1539 = vrot.slane %v1538, 2
    %v1540 = vadd.f32 %v1538, %v1539
    %v1541 = vrot.slane %v1540, 1
    %v1542 = vadd.f32 %v1540, %v1541
    %v1543 = vmul.f32 %v1542, %v1530
    %v1544 = vmul.f32 %v1531, %v1531
    %v1545 = vsub.f32 %v1543, %v1544
    %v1546 = vsub.f32 %v1511, %v1531
    %v1547 = vsub.f32 %v1516, %v1531
    %v1548 = vlaneseq
    %v1549 = vshrl.u32 %v1548, 7
    %v1550 = vsub.s32 0, %v1549
    %v1551 = vrot.slane %v1519, %v1550
    %v1552 = vmul.f32 %v1551, %v1546
    %v1553 = vmul.f32 %v1551, %v1547
    %v1554 = vadd.f32 %v1545, 1e-05
    %v1555 = vrsqrt.pop %v1554
    %v1556 = vmul.f32 %v1552, %v1555
    %v1557 = vmul.f32 %v1553, %v1555
    %v1558 = vlaneseq
    %v1559 = vshrl.u32 %v1558, 7
    %v1560 = vsub.s32 0, %v1559
    %v1561 = vrot.slane %v1520, %v1560
    %v1562 = vadd.f32 %v1556, %v1561
    %v1563 = vadd.f32 %v1557, %v1561
    %v1564 = vmax.f32 %v1562, 0.0
    %v1565 = vmax.f32 %v1563, 0.0
    %v1568 = vrot.slane %v1564, 1
    %v1569 = vrot.slane %v1565, 1
    %1570 = vrot.lane.b32.xlu0 %v1568, 64
    %v1571 = vpop.permute.xlu0 %1570
    %1572 = vrot.lane.b32.xlu0 %v1569, 64
    %v1573 = vpop.permute.xlu0 %1572
    %v1576 = vsel %vm1437, %v1564, %v1571
    %v1577 = vsel %vm1437, %v1565, %v1573
    %v1578 = vld [vmem:[%s1 + $0x60] sm:$0xff]
    %v1579 = vld [vmem:[%s1 + $0x68] sm:$0xff]
    %v1580 = vld [vmem:[%s1 + $0x70] sm:$0xff]
    %v1581 = vld [vmem:[%s1 + $0x78] sm:$0xff]
    %v1582 = vld [vmem:[%s1 + $0x80] sm:$0xff]
    %v1583 = vld [vmem:[%s1 + $0x88] sm:$0xff]
    %v1584 = vld [vmem:[%s1 + $0x90] sm:$0xff]
    %v1585 = vld [vmem:[%s1 + $0x98] sm:$0xff]
    %v1586 = vld [vmem:[%s1 + $0xa0] sm:$0xff]
    %v1587 = vld [vmem:[%s1 + $0xa8] sm:$0xff]
    %v1588 = vld [vmem:[%s1 + $0xb0] sm:$0xff]
    %v1589 = vld [vmem:[%s1 + $0xb8] sm:$0xff]
    %v1590 = vld [vmem:[%s1 + $0xc0] sm:$0xff]
    %v1591 = vld [vmem:[%s1 + $0xc8] sm:$0xff]
    %v1592 = vld [vmem:[%s1 + $0xd0] sm:$0xff]
    %v1593 = vld [vmem:[%s1 + $0xd8] sm:$0xff]
    %v1594 = vld [vmem:[%s2 + $0xb] sm:$0x1]
    %v1595 = vlaneseq
    %v1596 = vshrl.u32 %v1595, 7
    %v1597 = vsub.s32 0, %v1596
    %v1598 = vrot.slane %v1594, %v1597
    %v1601 = vcombine.high %v1576, %v1576
    %v1603 = vunpack.c.l.s4 1966171168
    %v1604 = vunpack.c.0.s8 %v1603
    %v1605 = vlaneseq
    %v1606 = vshrl.u32 %v1605, 7
    %v1607 = vsub.s32 %v1604, %v1606
    %v1608 = vrot.slane %v1576, %v1607
    %v1610 = vunpack.c.l.s4 1966171168
    %v1611 = vunpack.c.0.s8 %v1610
    %v1612 = vlaneseq
    %v1613 = vshrl.u32 %v1612, 7
    %v1614 = vsub.s32 %v1611, %v1613
    %v1615 = vrot.slane %v1601, %v1614
    %v1616 = vcombine.high %v1608, %v1608
    %v1617 = vcombine.high %v1615, %v1615
    %v1619 = vunpack.c.l.s4 1966171168
    %v1620 = vunpack.c.0.s8 %v1619
    %v1621 = vlaneseq
    %v1622 = vshrl.u32 %v1621, 7
    %v1623 = vsub.s32 %v1620, %v1622
    %v1624 = vrot.slane %v1608, %v1623
    %v1626 = vunpack.c.l.s4 1966171168
    %v1627 = vunpack.c.0.s8 %v1626
    %v1628 = vlaneseq
    %v1629 = vshrl.u32 %v1628, 7
    %v1630 = vsub.s32 %v1627, %v1629
    %v1631 = vrot.slane %v1615, %v1630
    %v1633 = vunpack.c.l.s4 1966171168
    %v1634 = vunpack.c.0.s8 %v1633
    %v1635 = vlaneseq
    %v1636 = vshrl.u32 %v1635, 7
    %v1637 = vsub.s32 %v1634, %v1636
    %v1638 = vrot.slane %v1616, %v1637
    %v1640 = vunpack.c.l.s4 1966171168
    %v1641 = vunpack.c.0.s8 %v1640
    %v1642 = vlaneseq
    %v1643 = vshrl.u32 %v1642, 7
    %v1644 = vsub.s32 %v1641, %v1643
    %v1645 = vrot.slane %v1617, %v1644
    %v1646 = vcombine.high %v1624, %v1624
    %v1647 = vcombine.high %v1631, %v1631
    %v1648 = vcombine.high %v1638, %v1638
    %v1649 = vcombine.high %v1577, %v1577
    %v1651 = vunpack.c.l.s4 1966171168
    %v1652 = vunpack.c.0.s8 %v1651
    %v1653 = vlaneseq
    %v1654 = vshrl.u32 %v1653, 7
    %v1655 = vsub.s32 %v1652, %v1654
    %v1656 = vrot.slane %v1577, %v1655
    %v1658 = vunpack.c.l.s4 1966171168
    %v1659 = vunpack.c.0.s8 %v1658
    %v1660 = vlaneseq
    %v1661 = vshrl.u32 %v1660, 7
    %v1662 = vsub.s32 %v1659, %v1661
    %v1663 = vrot.slane %v1649, %v1662
    %v1664 = vcombine.high %v1656, %v1656
    %v1665 = vcombine.high %v1663, %v1663
    %v1667 = vunpack.c.l.s4 1966171168
    %v1668 = vunpack.c.0.s8 %v1667
    %v1669 = vlaneseq
    %v1670 = vshrl.u32 %v1669, 7
    %v1671 = vsub.s32 %v1668, %v1670
    %v1672 = vrot.slane %v1656, %v1671
    %v1674 = vunpack.c.l.s4 1966171168
    %v1675 = vunpack.c.0.s8 %v1674
    %v1676 = vlaneseq
    %v1677 = vshrl.u32 %v1676, 7
    %v1678 = vsub.s32 %v1675, %v1677
    %v1679 = vrot.slane %v1663, %v1678
    %v1681 = vunpack.c.l.s4 1966171168
    %v1682 = vunpack.c.0.s8 %v1681
    %v1683 = vlaneseq
    %v1684 = vshrl.u32 %v1683, 7
    %v1685 = vsub.s32 %v1682, %v1684
    %v1686 = vrot.slane %v1664, %v1685
    %v1688 = vunpack.c.l.s4 1966171168
    %v1689 = vunpack.c.0.s8 %v1688
    %v1690 = vlaneseq
    %v1691 = vshrl.u32 %v1690, 7
    %v1692 = vsub.s32 %v1689, %v1691
    %v1693 = vrot.slane %v1665, %v1692
    %v1694 = vcombine.high %v1672, %v1672
    %v1695 = vcombine.high %v1679, %v1679
    %v1696 = vcombine.high %v1686, %v1686
    %v1698 = vcombine.high %v1598, %v1598
    %v1700 = vunpack.c.l.s4 1966171168
    %v1701 = vunpack.c.0.s8 %v1700
    %v1702 = vlaneseq
    %v1703 = vshrl.u32 %v1702, 7
    %v1704 = vsub.s32 %v1701, %v1703
    %v1705 = vrot.slane %v1598, %v1704
    %v1707 = vunpack.c.l.s4 1966171168
    %v1708 = vunpack.c.0.s8 %v1707
    %v1709 = vlaneseq
    %v1710 = vshrl.u32 %v1709, 7
    %v1711 = vsub.s32 %v1708, %v1710
    %v1712 = vrot.slane %v1698, %v1711
    %v1713 = vcombine.high %v1705, %v1705
    %v1714 = vcombine.high %v1712, %v1712
    %v1716 = vunpack.c.l.s4 1966171168
    %v1717 = vunpack.c.0.s8 %v1716
    %v1718 = vlaneseq
    %v1719 = vshrl.u32 %v1718, 7
    %v1720 = vsub.s32 %v1717, %v1719
    %v1721 = vrot.slane %v1705, %v1720
    %v1723 = vunpack.c.l.s4 1966171168
    %v1724 = vunpack.c.0.s8 %v1723
    %v1725 = vlaneseq
    %v1726 = vshrl.u32 %v1725, 7
    %v1727 = vsub.s32 %v1724, %v1726
    %v1728 = vrot.slane %v1712, %v1727
    %v1730 = vunpack.c.l.s4 1966171168
    %v1731 = vunpack.c.0.s8 %v1730
    %v1732 = vlaneseq
    %v1733 = vshrl.u32 %v1732, 7
    %v1734 = vsub.s32 %v1731, %v1733
    %v1735 = vrot.slane %v1713, %v1734
    %v1737 = vunpack.c.l.s4 1966171168
    %v1738 = vunpack.c.0.s8 %v1737
    %v1739 = vlaneseq
    %v1740 = vshrl.u32 %v1739, 7
    %v1741 = vsub.s32 %v1738, %v1740
    %v1742 = vrot.slane %v1714, %v1741
    %v1743 = vcombine.high %v1721, %v1721
    %v1744 = vcombine.high %v1728, %v1728
    %v1745 = vcombine.high %v1735, %v1735
    %v1746 = vcombine.low %v1624, %v1638
    %v1747 = vcombine.low %v1646, %v1648
    %v1748 = vcombine.low %v1631, %v1645
    %v1749 = vcombine.low %v1647, %v1672
    %v1751 = vunpack.c.l.s4 1966171168
    %v1752 = vunpack.c.0.s8 %v1751
    %v1753 = vlaneseq
    %v1754 = vshrl.u32 %v1753, 7
    %v1755 = vsub.s32 %v1752, %v1754
    %v1756 = vrot.slane %v1746, %v1755
    %v1758 = vunpack.c.l.s4 1966171168
    %v1759 = vunpack.c.0.s8 %v1758
    %v1760 = vlaneseq
    %v1761 = vshrl.u32 %v1760, 7
    %v1762 = vsub.s32 %v1759, %v1761
    %v1763 = vrot.slane %v1747, %v1762
    %v1765 = vunpack.c.l.s4 1966171168
    %v1766 = vunpack.c.0.s8 %v1765
    %v1767 = vlaneseq
    %v1768 = vshrl.u32 %v1767, 7
    %v1769 = vsub.s32 %v1766, %v1768
    %v1770 = vrot.slane %v1748, %v1769
    %v1772 = vunpack.c.l.s4 1966171168
    %v1773 = vunpack.c.0.s8 %v1772
    %v1774 = vlaneseq
    %v1775 = vshrl.u32 %v1774, 7
    %v1776 = vsub.s32 %v1773, %v1775
    %v1777 = vrot.slane %v1749, %v1776
    %v1778 = vcombine.low %v1756, %v1763
    %v1779 = vcombine.low %v1770, %v1777
    %v1781 = vunpack.c.l.s4 1966171168
    %v1782 = vunpack.c.0.s8 %v1781
    %v1783 = vlaneseq
    %v1784 = vshrl.u32 %v1783, 7
    %v1785 = vsub.s32 %v1782, %v1784
    %v1786 = vrot.slane %v1778, %v1785
    %v1788 = vunpack.c.l.s4 1966171168
    %v1789 = vunpack.c.0.s8 %v1788
    %v1790 = vlaneseq
    %v1791 = vshrl.u32 %v1790, 7
    %v1792 = vsub.s32 %v1789, %v1791
    %v1793 = vrot.slane %v1779, %v1792
    %v1794 = vcombine.low %v1786, %v1793
    %v1795 = vcombine.low %v1686, %v1694
    %v1796 = vcombine.low %v1696, %v1679
    %v1797 = vcombine.low %v1693, %v1695
    %v1799 = vunpack.c.l.s4 1966171168
    %v1800 = vunpack.c.0.s8 %v1799
    %v1801 = vlaneseq
    %v1802 = vshrl.u32 %v1801, 7
    %v1803 = vsub.s32 %v1800, %v1802
    %v1804 = vrot.slane %v1795, %v1803
    %v1806 = vunpack.c.l.s4 1966171168
    %v1807 = vunpack.c.0.s8 %v1806
    %v1808 = vlaneseq
    %v1809 = vshrl.u32 %v1808, 7
    %v1810 = vsub.s32 %v1807, %v1809
    %v1811 = vrot.slane %v1796, %v1810
    %v1813 = vunpack.c.l.s4 1966171168
    %v1814 = vunpack.c.0.s8 %v1813
    %v1815 = vlaneseq
    %v1816 = vshrl.u32 %v1815, 7
    %v1817 = vsub.s32 %v1814, %v1816
    %v1818 = vrot.slane %v1797, %v1817
    %v1819 = vcombine.low %v1804, %v1811
    %v1821 = vunpack.c.l.s4 1966171168
    %v1822 = vunpack.c.0.s8 %v1821
    %v1823 = vlaneseq
    %v1824 = vshrl.u32 %v1823, 7
    %v1825 = vsub.s32 %v1822, %v1824
    %v1826 = vrot.slane %v1819, %v1825
    %v1828 = vunpack.c.l.s4 1966171168
    %v1829 = vunpack.c.0.s8 %v1828
    %v1830 = vlaneseq
    %v1831 = vshrl.u32 %v1830, 7
    %v1832 = vsub.s32 %v1829, %v1831
    %v1833 = vrot.slane %v1818, %v1832
    %v1834 = vcombine.low %v1826, %v1833
    %v1837 = vcombine.low %v1721, %v1735
    %v1838 = vcombine.low %v1743, %v1745
    %v1839 = vcombine.low %v1728, %v1742
    %v1840 = vcombine.low %v1744, %v1721
    %v1842 = vunpack.c.l.s4 1966171168
    %v1843 = vunpack.c.0.s8 %v1842
    %v1844 = vlaneseq
    %v1845 = vshrl.u32 %v1844, 7
    %v1846 = vsub.s32 %v1843, %v1845
    %v1847 = vrot.slane %v1837, %v1846
    %v1849 = vunpack.c.l.s4 1966171168
    %v1850 = vunpack.c.0.s8 %v1849
    %v1851 = vlaneseq
    %v1852 = vshrl.u32 %v1851, 7
    %v1853 = vsub.s32 %v1850, %v1852
    %v1854 = vrot.slane %v1838, %v1853
    %v1856 = vunpack.c.l.s4 1966171168
    %v1857 = vunpack.c.0.s8 %v1856
    %v1858 = vlaneseq
    %v1859 = vshrl.u32 %v1858, 7
    %v1860 = vsub.s32 %v1857, %v1859
    %v1861 = vrot.slane %v1839, %v1860
    %v1863 = vunpack.c.l.s4 1966171168
    %v1864 = vunpack.c.0.s8 %v1863
    %v1865 = vlaneseq
    %v1866 = vshrl.u32 %v1865, 7
    %v1867 = vsub.s32 %v1864, %v1866
    %v1868 = vrot.slane %v1840, %v1867
    %v1869 = vcombine.low %v1847, %v1854
    %v1870 = vcombine.low %v1861, %v1868
    %v1872 = vunpack.c.l.s4 1966171168
    %v1873 = vunpack.c.0.s8 %v1872
    %v1874 = vlaneseq
    %v1875 = vshrl.u32 %v1874, 7
    %v1876 = vsub.s32 %v1873, %v1875
    %v1877 = vrot.slane %v1869, %v1876
    %v1879 = vunpack.c.l.s4 1966171168
    %v1880 = vunpack.c.0.s8 %v1879
    %v1881 = vlaneseq
    %v1882 = vshrl.u32 %v1881, 7
    %v1883 = vsub.s32 %v1880, %v1882
    %v1884 = vrot.slane %v1870, %v1883
    %v1885 = vcombine.low %v1877, %v1884
    %v1886 = vcombine.low %v1735, %v1743
    %v1887 = vcombine.low %v1745, %v1728
    %v1888 = vcombine.low %v1742, %v1744
    %v1890 = vunpack.c.l.s4 1966171168
    %v1891 = vunpack.c.0.s8 %v1890
    %v1892 = vlaneseq
    %v1893 = vshrl.u32 %v1892, 7
    %v1894 = vsub.s32 %v1891, %v1893
    %v1895 = vrot.slane %v1886, %v1894
    %v1897 = vunpack.c.l.s4 1966171168
    %v1898 = vunpack.c.0.s8 %v1897
    %v1899 = vlaneseq
    %v1900 = vshrl.u32 %v1899, 7
    %v1901 = vsub.s32 %v1898, %v1900
    %v1902 = vrot.slane %v1887, %v1901
    %v1904 = vunpack.c.l.s4 1966171168
    %v1905 = vunpack.c.0.s8 %v1904
    %v1906 = vlaneseq
    %v1907 = vshrl.u32 %v1906, 7
    %v1908 = vsub.s32 %v1905, %v1907
    %v1909 = vrot.slane %v1888, %v1908
    %v1910 = vcombine.low %v1895, %v1902
    %v1912 = vunpack.c.l.s4 1966171168
    %v1913 = vunpack.c.0.s8 %v1912
    %v1914 = vlaneseq
    %v1915 = vshrl.u32 %v1914, 7
    %v1916 = vsub.s32 %v1913, %v1915
    %v1917 = vrot.slane %v1910, %v1916
    %v1919 = vunpack.c.l.s4 1966171168
    %v1920 = vunpack.c.0.s8 %v1919
    %v1921 = vlaneseq
    %v1922 = vshrl.u32 %v1921, 7
    %v1923 = vsub.s32 %v1920, %v1922
    %v1924 = vrot.slane %v1909, %v1923
    %v1925 = vcombine.low %v1917, %v1924
    %1928 = vmatprep.subr.mxu0 0.0
    %1929 = vmatpush1.msra.mxu0 %v1593
    %1930 = vmatprep.subr.mxu0 0.0
    %1931 = vmatpush1.msra.mxu0 %v1592
    %1932 = vmatprep.subr.mxu0 0.0
    %1933 = vmatpush1.msra.mxu0 %v1591
    %1934 = vmatprep.subr.mxu0 0.0
    %1935 = vmatpush1.msra.mxu0 %v1590
    %1936 = vmatprep.subr.mxu0 0.0
    %1937 = vmatpush1.msra.mxu0 %v1589
    %1938 = vmatprep.subr.mxu0 0.0
    %1939 = vmatpush1.msra.mxu0 %v1588
    %1940 = vmatprep.subr.mxu0 0.0
    %1941 = vmatpush1.msra.mxu0 %v1587
    %1942 = vmatprep.subr.mxu0 0.0
    %1943 = vmatpush1.msra.mxu0 %v1586
    %1944 = vmatprep.subr.mxu0 0.0
    %1945 = vmatpush1.msra.mxu0 %v1585
    %1946 = vmatprep.subr.mxu0 0.0
    %1947 = vmatpush1.msra.mxu0 %v1584
    %1948 = vmatprep.subr.mxu0 0.0
    %1949 = vmatpush1.msra.mxu0 %v1583
    %1950 = vmatprep.subr.mxu0 0.0
    %1951 = vmatpush1.msra.mxu0 %v1582
    %1952 = vmatprep.subr.mxu0 0.0
    %1953 = vmatpush1.msra.mxu0 %v1581
    %1954 = vmatprep.subr.mxu0 0.0
    %1955 = vmatpush1.msra.mxu0 %v1580
    %1956 = vmatprep.subr.mxu0 0.0
    %1957 = vmatpush1.msra.mxu0 %v1579
    %1958 = vmatprep.subr.mxu0 0.0
    %1959 = vmatpush1.msra.mxu0 %v1578
    %1960 = vmatprep.subr.mxu0 0.0
    %1961 = vmatpush2.msra.mxu0 0.0
    %1962 = vmatprep.subr.mxu0 0.0
    %1963 = vmatpush2.msra.mxu0 0.0
    %1964 = vmatprep.subr.mxu0 0.0
    %1965 = vmatpush2.msra.mxu0 0.0
    %1966 = vmatprep.subr.mxu0 0.0
    %1967 = vmatpush2.msra.mxu0 0.0
    %1968 = vmatprep.subr.mxu0 0.0
    %1969 = vmatpush2.msra.mxu0 0.0
    %1970 = vmatprep.subr.mxu0 0.0
    %1971 = vmatpush2.msra.mxu0 0.0
    %1972 = vmatprep.subr.mxu0 0.0
    %1973 = vmatpush2.msra.mxu0 0.0
    %1974 = vmatprep.subr.mxu0 0.0
    %1975 = vmatpush2.msra.mxu0 0.0
    %1976 = vmatprep.subr.mxu0 0.0
    %1977 = vmatpush2.msra.mxu0 0.0
    %1978 = vmatprep.subr.mxu0 0.0
    %1979 = vmatpush2.msra.mxu0 0.0
    %1980 = vmatprep.subr.mxu0 0.0
    %1981 = vmatpush2.msra.mxu0 0.0
    %1982 = vmatprep.subr.mxu0 0.0
    %1983 = vmatpush2.msra.mxu0 0.0
    %1984 = vmatprep.subr.mxu0 0.0
    %1985 = vmatpush2.msra.mxu0 0.0
    %1986 = vmatprep.subr.mxu0 0.0
    %1987 = vmatpush2.msra.mxu0 0.0
    %1988 = vmatprep.subr.mxu0 0.0
    %1989 = vmatpush2.msra.mxu0 0.0
    %1990 = vmatprep.subr.mxu0 0.0
    %1991 = vmatpush2.msra.mxu0 0.0
    %1992 = vmatprep.mubr.f32.mxu0 0.0
    %1993 = vmatmul.mubr.f32.gmra.mxu0 %v1794
    %v1994 = vpop.f32.mrf.mxu0
    %v1995 = vadd.f32 %v1885, %v1994
    %v1996 = vpop.f32.mrf.mxu0
    %1997 = vmatprep.mubr.f32.mxu0 0.0
    %1998 = vmatmul.mubr.f32.gmra.mxu0 %v1834
    %v1999 = vpop.f32.mrf.mxu0
    %v2000 = vadd.f32 %v1925, %v1999
    %v2001 = vpop.f32.mrf.mxu0
    %2002 = vdwg.mxu0
    %v2005 = vcombine.high %v1995, %v1995
    %v2007 = vunpack.c.l.s4 1966171168
    %v2008 = vunpack.c.0.s8 %v2007
    %v2009 = vlaneseq
    %v2010 = vshrl.u32 %v2009, 7
    %v2011 = vsub.s32 %v2008, %v2010
    %v2012 = vrot.slane %v1995, %v2011
    %v2014 = vunpack.c.l.s4 1966171168
    %v2015 = vunpack.c.0.s8 %v2014
    %v2016 = vlaneseq
    %v2017 = vshrl.u32 %v2016, 7
    %v2018 = vsub.s32 %v2015, %v2017
    %v2019 = vrot.slane %v2005, %v2018
    %v2020 = vcombine.high %v2012, %v2012
    %v2021 = vcombine.high %v2019, %v2019
    %v2023 = vunpack.c.l.s4 1966171168
    %v2024 = vunpack.c.0.s8 %v2023
    %v2025 = vlaneseq
    %v2026 = vshrl.u32 %v2025, 7
    %v2027 = vsub.s32 %v2024, %v2026
    %v2028 = vrot.slane %v2012, %v2027
    %v2030 = vunpack.c.l.s4 1966171168
    %v2031 = vunpack.c.0.s8 %v2030
    %v2032 = vlaneseq
    %v2033 = vshrl.u32 %v2032, 7
    %v2034 = vsub.s32 %v2031, %v2033
    %v2035 = vrot.slane %v2019, %v2034
    %v2037 = vunpack.c.l.s4 1966171168
    %v2038 = vunpack.c.0.s8 %v2037
    %v2039 = vlaneseq
    %v2040 = vshrl.u32 %v2039, 7
    %v2041 = vsub.s32 %v2038, %v2040
    %v2042 = vrot.slane %v2020, %v2041
    %v2044 = vunpack.c.l.s4 1966171168
    %v2045 = vunpack.c.0.s8 %v2044
    %v2046 = vlaneseq
    %v2047 = vshrl.u32 %v2046, 7
    %v2048 = vsub.s32 %v2045, %v2047
    %v2049 = vrot.slane %v2021, %v2048
    %v2050 = vcombine.high %v2028, %v2028
    %v2051 = vcombine.high %v2035, %v2035
    %v2052 = vcombine.high %v2042, %v2042
    %v2053 = vcombine.high %v2049, %v2049
    %v2054 = vcombine.high %v2000, %v2000
    %v2056 = vunpack.c.l.s4 1966171168
    %v2057 = vunpack.c.0.s8 %v2056
    %v2058 = vlaneseq
    %v2059 = vshrl.u32 %v2058, 7
    %v2060 = vsub.s32 %v2057, %v2059
    %v2061 = vrot.slane %v2000, %v2060
    %v2063 = vunpack.c.l.s4 1966171168
    %v2064 = vunpack.c.0.s8 %v2063
    %v2065 = vlaneseq
    %v2066 = vshrl.u32 %v2065, 7
    %v2067 = vsub.s32 %v2064, %v2066
    %v2068 = vrot.slane %v2054, %v2067
    %v2069 = vcombine.high %v2061, %v2061
    %v2070 = vcombine.high %v2068, %v2068
    %v2072 = vunpack.c.l.s4 1966171168
    %v2073 = vunpack.c.0.s8 %v2072
    %v2074 = vlaneseq
    %v2075 = vshrl.u32 %v2074, 7
    %v2076 = vsub.s32 %v2073, %v2075
    %v2077 = vrot.slane %v2061, %v2076
    %v2079 = vunpack.c.l.s4 1966171168
    %v2080 = vunpack.c.0.s8 %v2079
    %v2081 = vlaneseq
    %v2082 = vshrl.u32 %v2081, 7
    %v2083 = vsub.s32 %v2080, %v2082
    %v2084 = vrot.slane %v2068, %v2083
    %v2086 = vunpack.c.l.s4 1966171168
    %v2087 = vunpack.c.0.s8 %v2086
    %v2088 = vlaneseq
    %v2089 = vshrl.u32 %v2088, 7
    %v2090 = vsub.s32 %v2087, %v2089
    %v2091 = vrot.slane %v2069, %v2090
    %v2093 = vunpack.c.l.s4 1966171168
    %v2094 = vunpack.c.0.s8 %v2093
    %v2095 = vlaneseq
    %v2096 = vshrl.u32 %v2095, 7
    %v2097 = vsub.s32 %v2094, %v2096
    %v2098 = vrot.slane %v2070, %v2097
    %v2099 = vcombine.high %v2077, %v2077
    %v2100 = vcombine.high %v2091, %v2091
    %v2115 = vld [vmem:[%s2 + $0xc] sm:$0x1]
    %v2116 = vld [vmem:[%s2 + $0xd] sm:$0x1]
    %v2117 = vcombine.low %v2028, %v2042
    %v2118 = vcombine.low %v2050, %v2052
    %v2119 = vcombine.low %v2035, %v2049
    %v2121 = vunpack.c.l.s4 1966171168
    %v2122 = vunpack.c.0.s8 %v2121
    %v2123 = vlaneseq
    %v2124 = vshrl.u32 %v2123, 7
    %v2125 = vsub.s32 %v2122, %v2124
    %v2126 = vrot.slane %v2117, %v2125
    %v2128 = vunpack.c.l.s4 1966171168
    %v2129 = vunpack.c.0.s8 %v2128
    %v2130 = vlaneseq
    %v2131 = vshrl.u32 %v2130, 7
    %v2132 = vsub.s32 %v2129, %v2131
    %v2133 = vrot.slane %v2118, %v2132
    %v2135 = vunpack.c.l.s4 1966171168
    %v2136 = vunpack.c.0.s8 %v2135
    %v2137 = vlaneseq
    %v2138 = vshrl.u32 %v2137, 7
    %v2139 = vsub.s32 %v2136, %v2138
    %v2140 = vrot.slane %v2119, %v2139
    %v2142 = vunpack.c.l.s4 1966171168
    %v2143 = vunpack.c.0.s8 %v2142
    %v2144 = vlaneseq
    %v2145 = vshrl.u32 %v2144, 7
    %v2146 = vsub.s32 %v2143, %v2145
    %v2147 = vrot.slane %v2051, %v2146
    %v2148 = vcombine.low %v2126, %v2133
    %v2149 = vcombine.low %v2140, %v2147
    %v2151 = vunpack.c.l.s4 1966171168
    %v2152 = vunpack.c.0.s8 %v2151
    %v2153 = vlaneseq
    %v2154 = vshrl.u32 %v2153, 7
    %v2155 = vsub.s32 %v2152, %v2154
    %v2156 = vrot.slane %v2148, %v2155
    %v2158 = vunpack.c.l.s4 1966171168
    %v2159 = vunpack.c.0.s8 %v2158
    %v2160 = vlaneseq
    %v2161 = vshrl.u32 %v2160, 7
    %v2162 = vsub.s32 %v2159, %v2161
    %v2163 = vrot.slane %v2149, %v2162
    %v2164 = vcombine.low %v2156, %v2163
    %v2165 = vcombine.low %v2053, %v2077
    %v2166 = vcombine.low %v2091, %v2099
    %v2167 = vcombine.low %v2100, %v2084
    %v2169 = vunpack.c.l.s4 1966171168
    %v2170 = vunpack.c.0.s8 %v2169
    %v2171 = vlaneseq
    %v2172 = vshrl.u32 %v2171, 7
    %v2173 = vsub.s32 %v2170, %v2172
    %v2174 = vrot.slane %v2165, %v2173
    %v2176 = vunpack.c.l.s4 1966171168
    %v2177 = vunpack.c.0.s8 %v2176
    %v2178 = vlaneseq
    %v2179 = vshrl.u32 %v2178, 7
    %v2180 = vsub.s32 %v2177, %v2179
    %v2181 = vrot.slane %v2166, %v2180
    %v2183 = vunpack.c.l.s4 1966171168
    %v2184 = vunpack.c.0.s8 %v2183
    %v2185 = vlaneseq
    %v2186 = vshrl.u32 %v2185, 7
    %v2187 = vsub.s32 %v2184, %v2186
    %v2188 = vrot.slane %v2167, %v2187
    %v2190 = vunpack.c.l.s4 1966171168
    %v2191 = vunpack.c.0.s8 %v2190
    %v2192 = vlaneseq
    %v2193 = vshrl.u32 %v2192, 7
    %v2194 = vsub.s32 %v2191, %v2193
    %v2195 = vrot.slane %v2098, %v2194
    %v2196 = vcombine.low %v2174, %v2181
    %v2197 = vcombine.low %v2188, %v2195
    %v2199 = vunpack.c.l.s4 1966171168
    %v2200 = vunpack.c.0.s8 %v2199
    %v2201 = vlaneseq
    %v2202 = vshrl.u32 %v2201, 7
    %v2203 = vsub.s32 %v2200, %v2202
    %v2204 = vrot.slane %v2196, %v2203
    %v2206 = vunpack.c.l.s4 1966171168
    %v2207 = vunpack.c.0.s8 %v2206
    %v2208 = vlaneseq
    %v2209 = vshrl.u32 %v2208, 7
    %v2210 = vsub.s32 %v2207, %v2209
    %v2211 = vrot.slane %v2197, %v2210
    %v2212 = vcombine.low %v2204, %v2211
    %v2215 = vsel %vm70, %v2164, 0.0
    %v2216 = vsel %vm70, %v2212, 0.0
    %v2217 = vadd.f32 %v2215, %v2216
    %v2218 = vrot.slane %v2217, 4
    %v2219 = vadd.f32 %v2217, %v2218
    %v2220 = vrot.slane %v2219, 2
    %v2221 = vadd.f32 %v2219, %v2220
    %v2222 = vrot.slane %v2221, 1
    %v2223 = vadd.f32 %v2221, %v2222
    %v2224 = vrcp.pop 14.0
    %v2225 = vmul.f32 %v2223, %v2224
    %v2226 = vmul.f32 %v2028, %v2028
    %v2227 = vmul.f32 %v2042, %v2042
    %v2228 = vmul.f32 %v2050, %v2050
    %v2229 = vmul.f32 %v2052, %v2052
    %v2230 = vmul.f32 %v2035, %v2035
    %v2231 = vmul.f32 %v2049, %v2049
    %v2232 = vmul.f32 %v2051, %v2051
    %v2233 = vmul.f32 %v2053, %v2053
    %v2234 = vmul.f32 %v2077, %v2077
    %v2235 = vmul.f32 %v2091, %v2091
    %v2236 = vmul.f32 %v2099, %v2099
    %v2237 = vmul.f32 %v2100, %v2100
    %v2238 = vmul.f32 %v2084, %v2084
    %v2239 = vmul.f32 %v2098, %v2098
    %v2254 = vcombine.low %v2226, %v2227
    %v2255 = vcombine.low %v2228, %v2229
    %v2256 = vcombine.low %v2230, %v2231
    %v2258 = vunpack.c.l.s4 1966171168
    %v2259 = vunpack.c.0.s8 %v2258
    %v2260 = vlaneseq
    %v2261 = vshrl.u32 %v2260, 7
    %v2262 = vsub.s32 %v2259, %v2261
    %v2263 = vrot.slane %v2254, %v2262
    %v2265 = vunpack.c.l.s4 1966171168
    %v2266 = vunpack.c.0.s8 %v2265
    %v2267 = vlaneseq
    %v2268 = vshrl.u32 %v2267, 7
    %v2269 = vsub.s32 %v2266, %v2268
    %v2270 = vrot.slane %v2255, %v2269
    %v2272 = vunpack.c.l.s4 1966171168
    %v2273 = vunpack.c.0.s8 %v2272
    %v2274 = vlaneseq
    %v2275 = vshrl.u32 %v2274, 7
    %v2276 = vsub.s32 %v2273, %v2275
    %v2277 = vrot.slane %v2256, %v2276
    %v2279 = vunpack.c.l.s4 1966171168
    %v2280 = vunpack.c.0.s8 %v2279
    %v2281 = vlaneseq
    %v2282 = vshrl.u32 %v2281, 7
    %v2283 = vsub.s32 %v2280, %v2282
    %v2284 = vrot.slane %v2232, %v2283
    %v2285 = vcombine.low %v2263, %v2270
    %v2286 = vcombine.low %v2277, %v2284
    %v2288 = vunpack.c.l.s4 1966171168
    %v2289 = vunpack.c.0.s8 %v2288
    %v2290 = vlaneseq
    %v2291 = vshrl.u32 %v2290, 7
    %v2292 = vsub.s32 %v2289, %v2291
    %v2293 = vrot.slane %v2285, %v2292
    %v2295 = vunpack.c.l.s4 1966171168
    %v2296 = vunpack.c.0.s8 %v2295
    %v2297 = vlaneseq
    %v2298 = vshrl.u32 %v2297, 7
    %v2299 = vsub.s32 %v2296, %v2298
    %v2300 = vrot.slane %v2286, %v2299
    %v2301 = vcombine.low %v2293, %v2300
    %v2302 = vcombine.low %v2233, %v2234
    %v2303 = vcombine.low %v2235, %v2236
    %v2304 = vcombine.low %v2237, %v2238
    %v2306 = vunpack.c.l.s4 1966171168
    %v2307 = vunpack.c.0.s8 %v2306
    %v2308 = vlaneseq
    %v2309 = vshrl.u32 %v2308, 7
    %v2310 = vsub.s32 %v2307, %v2309
    %v2311 = vrot.slane %v2302, %v2310
    %v2313 = vunpack.c.l.s4 1966171168
    %v2314 = vunpack.c.0.s8 %v2313
    %v2315 = vlaneseq
    %v2316 = vshrl.u32 %v2315, 7
    %v2317 = vsub.s32 %v2314, %v2316
    %v2318 = vrot.slane %v2303, %v2317
    %v2320 = vunpack.c.l.s4 1966171168
    %v2321 = vunpack.c.0.s8 %v2320
    %v2322 = vlaneseq
    %v2323 = vshrl.u32 %v2322, 7
    %v2324 = vsub.s32 %v2321, %v2323
    %v2325 = vrot.slane %v2304, %v2324
    %v2327 = vunpack.c.l.s4 1966171168
    %v2328 = vunpack.c.0.s8 %v2327
    %v2329 = vlaneseq
    %v2330 = vshrl.u32 %v2329, 7
    %v2331 = vsub.s32 %v2328, %v2330
    %v2332 = vrot.slane %v2239, %v2331
    %v2333 = vcombine.low %v2311, %v2318
    %v2334 = vcombine.low %v2325, %v2332
    %v2336 = vunpack.c.l.s4 1966171168
    %v2337 = vunpack.c.0.s8 %v2336
    %v2338 = vlaneseq
    %v2339 = vshrl.u32 %v2338, 7
    %v2340 = vsub.s32 %v2337, %v2339
    %v2341 = vrot.slane %v2333, %v2340
    %v2343 = vunpack.c.l.s4 1966171168
    %v2344 = vunpack.c.0.s8 %v2343
    %v2345 = vlaneseq
    %v2346 = vshrl.u32 %v2345, 7
    %v2347 = vsub.s32 %v2344, %v2346
    %v2348 = vrot.slane %v2334, %v2347
    %v2349 = vcombine.low %v2341, %v2348
    %v2352 = vsel %vm70, %v2301, 0.0
    %v2353 = vsel %vm70, %v2349, 0.0
    %v2354 = vadd.f32 %v2352, %v2353
    %v2355 = vrot.slane %v2354, 4
    %v2356 = vadd.f32 %v2354, %v2355
    %v2357 = vrot.slane %v2356, 2
    %v2358 = vadd.f32 %v2356, %v2357
    %v2359 = vrot.slane %v2358, 1
    %v2360 = vadd.f32 %v2358, %v2359
    %v2361 = vmul.f32 %v2360, %v2224
    %v2362 = vmul.f32 %v2225, %v2225
    %v2363 = vsub.f32 %v2361, %v2362
    %v2365 = vcombine.high %v2225, %v2225
    %v2367 = vunpack.c.l.s4 1966171168
    %v2368 = vunpack.c.0.s8 %v2367
    %v2369 = vlaneseq
    %v2370 = vshrl.u32 %v2369, 7
    %v2371 = vsub.s32 %v2368, %v2370
    %v2372 = vrot.slane %v2225, %v2371
    %v2374 = vunpack.c.l.s4 1966171168
    %v2375 = vunpack.c.0.s8 %v2374
    %v2376 = vlaneseq
    %v2377 = vshrl.u32 %v2376, 7
    %v2378 = vsub.s32 %v2375, %v2377
    %v2379 = vrot.slane %v2365, %v2378
    %v2380 = vcombine.high %v2372, %v2372
    %v2381 = vcombine.high %v2379, %v2379
    %v2383 = vunpack.c.l.s4 1966171168
    %v2384 = vunpack.c.0.s8 %v2383
    %v2385 = vlaneseq
    %v2386 = vshrl.u32 %v2385, 7
    %v2387 = vsub.s32 %v2384, %v2386
    %v2388 = vrot.slane %v2372, %v2387
    %v2390 = vunpack.c.l.s4 1966171168
    %v2391 = vunpack.c.0.s8 %v2390
    %v2392 = vlaneseq
    %v2393 = vshrl.u32 %v2392, 7
    %v2394 = vsub.s32 %v2391, %v2393
    %v2395 = vrot.slane %v2379, %v2394
    %v2397 = vunpack.c.l.s4 1966171168
    %v2398 = vunpack.c.0.s8 %v2397
    %v2399 = vlaneseq
    %v2400 = vshrl.u32 %v2399, 7
    %v2401 = vsub.s32 %v2398, %v2400
    %v2402 = vrot.slane %v2380, %v2401
    %v2404 = vunpack.c.l.s4 1966171168
    %v2405 = vunpack.c.0.s8 %v2404
    %v2406 = vlaneseq
    %v2407 = vshrl.u32 %v2406, 7
    %v2408 = vsub.s32 %v2405, %v2407
    %v2409 = vrot.slane %v2381, %v2408
    %v2410 = vcombine.high %v2388, %v2388
    %v2411 = vcombine.high %v2395, %v2395
    %v2412 = vcombine.high %v2402, %v2402
    %v2420 = vsub.f32 %v2028, %v2388
    %v2421 = vsub.f32 %v2042, %v2402
    %v2422 = vsub.f32 %v2050, %v2410
    %v2423 = vsub.f32 %v2052, %v2412
    %v2424 = vsub.f32 %v2035, %v2395
    %v2425 = vsub.f32 %v2049, %v2409
    %v2426 = vsub.f32 %v2051, %v2411
    %v2427 = vsub.f32 %v2053, %v2388
    %v2428 = vsub.f32 %v2077, %v2402
    %v2429 = vsub.f32 %v2091, %v2410
    %v2430 = vsub.f32 %v2099, %v2412
    %v2431 = vsub.f32 %v2100, %v2395
    %v2432 = vsub.f32 %v2084, %v2409
    %v2433 = vsub.f32 %v2098, %v2411
    %v2434 = vlaneseq
    %v2435 = vshrl.u32 %v2434, 7
    %v2436 = vsub.s32 0, %v2435
    %v2437 = vrot.slane %v2115, %v2436
    %v2452 = vcombine.low %v2420, %v2421
    %v2453 = vcombine.low %v2422, %v2423
    %v2454 = vcombine.low %v2424, %v2425
    %v2456 = vunpack.c.l.s4 1966171168
    %v2457 = vunpack.c.0.s8 %v2456
    %v2458 = vlaneseq
    %v2459 = vshrl.u32 %v2458, 7
    %v2460 = vsub.s32 %v2457, %v2459
    %v2461 = vrot.slane %v2452, %v2460
    %v2463 = vunpack.c.l.s4 1966171168
    %v2464 = vunpack.c.0.s8 %v2463
    %v2465 = vlaneseq
    %v2466 = vshrl.u32 %v2465, 7
    %v2467 = vsub.s32 %v2464, %v2466
    %v2468 = vrot.slane %v2453, %v2467
    %v2470 = vunpack.c.l.s4 1966171168
    %v2471 = vunpack.c.0.s8 %v2470
    %v2472 = vlaneseq
    %v2473 = vshrl.u32 %v2472, 7
    %v2474 = vsub.s32 %v2471, %v2473
    %v2475 = vrot.slane %v2454, %v2474
    %v2477 = vunpack.c.l.s4 1966171168
    %v2478 = vunpack.c.0.s8 %v2477
    %v2479 = vlaneseq
    %v2480 = vshrl.u32 %v2479, 7
    %v2481 = vsub.s32 %v2478, %v2480
    %v2482 = vrot.slane %v2426, %v2481
    %v2483 = vcombine.low %v2461, %v2468
    %v2484 = vcombine.low %v2475, %v2482
    %v2486 = vunpack.c.l.s4 1966171168
    %v2487 = vunpack.c.0.s8 %v2486
    %v2488 = vlaneseq
    %v2489 = vshrl.u32 %v2488, 7
    %v2490 = vsub.s32 %v2487, %v2489
    %v2491 = vrot.slane %v2483, %v2490
    %v2493 = vunpack.c.l.s4 1966171168
    %v2494 = vunpack.c.0.s8 %v2493
    %v2495 = vlaneseq
    %v2496 = vshrl.u32 %v2495, 7
    %v2497 = vsub.s32 %v2494, %v2496
    %v2498 = vrot.slane %v2484, %v2497
    %v2499 = vcombine.low %v2491, %v2498
    %v2500 = vcombine.low %v2427, %v2428
    %v2501 = vcombine.low %v2429, %v2430
    %v2502 = vcombine.low %v2431, %v2432
    %v2504 = vunpack.c.l.s4 1966171168
    %v2505 = vunpack.c.0.s8 %v2504
    %v2506 = vlaneseq
    %v2507 = vshrl.u32 %v2506, 7
    %v2508 = vsub.s32 %v2505, %v2507
    %v2509 = vrot.slane %v2500, %v2508
    %v2511 = vunpack.c.l.s4 1966171168
    %v2512 = vunpack.c.0.s8 %v2511
    %v2513 = vlaneseq
    %v2514 = vshrl.u32 %v2513, 7
    %v2515 = vsub.s32 %v2512, %v2514
    %v2516 = vrot.slane %v2501, %v2515
    %v2518 = vunpack.c.l.s4 1966171168
    %v2519 = vunpack.c.0.s8 %v2518
    %v2520 = vlaneseq
    %v2521 = vshrl.u32 %v2520, 7
    %v2522 = vsub.s32 %v2519, %v2521
    %v2523 = vrot.slane %v2502, %v2522
    %v2525 = vunpack.c.l.s4 1966171168
    %v2526 = vunpack.c.0.s8 %v2525
    %v2527 = vlaneseq
    %v2528 = vshrl.u32 %v2527, 7
    %v2529 = vsub.s32 %v2526, %v2528
    %v2530 = vrot.slane %v2433, %v2529
    %v2531 = vcombine.low %v2509, %v2516
    %v2532 = vcombine.low %v2523, %v2530
    %v2534 = vunpack.c.l.s4 1966171168
    %v2535 = vunpack.c.0.s8 %v2534
    %v2536 = vlaneseq
    %v2537 = vshrl.u32 %v2536, 7
    %v2538 = vsub.s32 %v2535, %v2537
    %v2539 = vrot.slane %v2531, %v2538
    %v2541 = vunpack.c.l.s4 1966171168
    %v2542 = vunpack.c.0.s8 %v2541
    %v2543 = vlaneseq
    %v2544 = vshrl.u32 %v2543, 7
    %v2545 = vsub.s32 %v2542, %v2544
    %v2546 = vrot.slane %v2532, %v2545
    %v2547 = vcombine.low %v2539, %v2546
    %v2550 = vmul.f32 %v2437, %v2499
    %v2551 = vmul.f32 %v2437, %v2547
    %v2552 = vadd.f32 %v2363, 1e-05
    %v2553 = vrsqrt.pop %v2552
    %v2554 = vmul.f32 %v2550, %v2553
    %v2555 = vmul.f32 %v2551, %v2553
    %v2556 = vlaneseq
    %v2557 = vshrl.u32 %v2556, 7
    %v2558 = vsub.s32 0, %v2557
    %v2559 = vrot.slane %v2116, %v2558
    %v2560 = vadd.f32 %v2554, %v2559
    %v2561 = vadd.f32 %v2555, %v2559
    %v2562 = vmax.f32 %v2560, 0.0
    %v2563 = vmax.f32 %v2561, 0.0
    %v2566 = vrot.slane %v2563, 7
    %vm2567 = vcmask 1041409
    %v2568 = vsel %vm2567, %v2566, %v2562
    %v2570 = vrot.slane %v2562, 1
    %v2571 = vsel %vm2567, %v2563, %v2570
    %v2573 = vrot.slane %v2562, 2
    %v2574 = vrot.slane %v2563, 1
    %v2575 = vsel %vm2567, %v2574, %v2573
    %v2577 = vrot.slane %v2562, 3
    %v2578 = vrot.slane %v2563, 2
    %v2579 = vsel %vm2567, %v2578, %v2577
    %v2581 = vrot.slane %v2562, 4
    %v2582 = vrot.slane %v2563, 3
    %v2583 = vsel %vm2567, %v2582, %v2581
    %v2585 = vrot.slane %v2562, 5
    %v2586 = vrot.slane %v2563, 4
    %v2587 = vsel %vm2567, %v2586, %v2585
    %v2589 = vrot.slane %v2562, 6
    %v2590 = vrot.slane %v2563, 5
    %v2591 = vsel %vm2567, %v2590, %v2589
    %v2593 = vld [vmem:[%s1 + $0xe0] sm:$0xff]
    %v2594 = vld [vmem:[%s1 + $0xe8] sm:$0xff]
    %v2595 = vld [vmem:[%s1 + $0xf0] sm:$0xff]
    %v2596 = vld [vmem:[%s1 + $0xf8] sm:$0xff]
    %v2597 = vld [vmem:[%s1 + $0x100] sm:$0xff]
    %v2598 = vld [vmem:[%s1 + $0x108] sm:$0xff]
    %v2599 = vld [vmem:[%s1 + $0x110] sm:$0xff]
    %v2600 = vld [vmem:[%s1 + $0x118] sm:$0xff]
    %v2601 = vld [vmem:[%s1 + $0x120] sm:$0xff]
    %v2602 = vld [vmem:[%s1 + $0x128] sm:$0xff]
    %v2603 = vld [vmem:[%s1 + $0x130] sm:$0xff]
    %v2604 = vld [vmem:[%s1 + $0x138] sm:$0xff]
    %v2605 = vld [vmem:[%s1 + $0x140] sm:$0xff]
    %v2606 = vld [vmem:[%s1 + $0x148] sm:$0xff]
    %v2607 = vld [vmem:[%s1 + $0x150] sm:$0xff]
    %v2608 = vld [vmem:[%s1 + $0x158] sm:$0xff]
    %v2609 = vld [vmem:[%s1 + $0x160] sm:$0xff]
    %v2610 = vld [vmem:[%s1 + $0x168] sm:$0xff]
    %v2611 = vld [vmem:[%s1 + $0x170] sm:$0xff]
    %v2612 = vld [vmem:[%s1 + $0x178] sm:$0xff]
    %v2613 = vld [vmem:[%s1 + $0x180] sm:$0xff]
    %v2614 = vld [vmem:[%s1 + $0x188] sm:$0xff]
    %v2615 = vld [vmem:[%s1 + $0x190] sm:$0xff]
    %v2616 = vld [vmem:[%s1 + $0x198] sm:$0xff]
    %v2617 = vld [vmem:[%s1 + $0x1a0] sm:$0xff]
    %v2618 = vld [vmem:[%s1 + $0x1a8] sm:$0xff]
    %v2619 = vld [vmem:[%s1 + $0x1b0] sm:$0xff]
    %v2620 = vld [vmem:[%s1 + $0x1b8] sm:$0xff]
    %v2621 = vld [vmem:[%s1 + $0x1c0] sm:$0xff]
    %v2622 = vld [vmem:[%s1 + $0x1c8] sm:$0xff]
    %v2623 = vld [vmem:[%s1 + $0x1d0] sm:$0xff]
    %v2624 = vld [vmem:[%s1 + $0x1d8] sm:$0xff]
    %v2625 = vld [vmem:[%s1 + $0x1e0] sm:$0xff]
    %v2626 = vld [vmem:[%s1 + $0x1e8] sm:$0xff]
    %v2627 = vld [vmem:[%s1 + $0x1f0] sm:$0xff]
    %v2628 = vld [vmem:[%s1 + $0x1f8] sm:$0xff]
    %v2629 = vld [vmem:[%s1 + $0x200] sm:$0xff]
    %v2630 = vld [vmem:[%s1 + $0x208] sm:$0xff]
    %v2631 = vld [vmem:[%s1 + $0x210] sm:$0xff]
    %v2632 = vld [vmem:[%s1 + $0x218] sm:$0xff]
    %v2633 = vld [vmem:[%s1 + $0x220] sm:$0xff]
    %v2634 = vld [vmem:[%s1 + $0x228] sm:$0xff]
    %v2635 = vld [vmem:[%s1 + $0x230] sm:$0xff]
    %v2636 = vld [vmem:[%s1 + $0x238] sm:$0xff]
    %v2637 = vld [vmem:[%s1 + $0x240] sm:$0xff]
    %v2638 = vld [vmem:[%s1 + $0x248] sm:$0xff]
    %v2639 = vld [vmem:[%s1 + $0x250] sm:$0xff]
    %v2640 = vld [vmem:[%s1 + $0x258] sm:$0xff]
    %v2641 = vld [vmem:[%s1 + $0x260] sm:$0xff]
    %v2642 = vld [vmem:[%s1 + $0x268] sm:$0xff]
    %v2643 = vld [vmem:[%s1 + $0x270] sm:$0xff]
    %v2644 = vld [vmem:[%s1 + $0x278] sm:$0xff]
    %v2645 = vld [vmem:[%s1 + $0x280] sm:$0xff]
    %v2646 = vld [vmem:[%s1 + $0x288] sm:$0xff]
    %v2647 = vld [vmem:[%s1 + $0x290] sm:$0xff]
    %v2648 = vld [vmem:[%s1 + $0x298] sm:$0xff]
    %v2649 = vld [vmem:[%s1 + $0x2a0] sm:$0xff]
    %v2650 = vld [vmem:[%s1 + $0x2a8] sm:$0xff]
    %v2651 = vld [vmem:[%s1 + $0x2b0] sm:$0xff]
    %v2652 = vld [vmem:[%s1 + $0x2b8] sm:$0xff]
    %v2653 = vld [vmem:[%s1 + $0x2c0] sm:$0xff]
    %v2654 = vld [vmem:[%s1 + $0x2c8] sm:$0xff]
    %v2655 = vld [vmem:[%s1 + $0x2d0] sm:$0xff]
    %v2656 = vld [vmem:[%s1 + $0x2d8] sm:$0xff]
    %v2657 = vld [vmem:[%s1 + $0x2e0] sm:$0xff]
    %v2658 = vld [vmem:[%s1 + $0x2e8] sm:$0xff]
    %v2659 = vld [vmem:[%s1 + $0x2f0] sm:$0xff]
    %v2660 = vld [vmem:[%s1 + $0x2f8] sm:$0xff]
    %v2661 = vld [vmem:[%s1 + $0x300] sm:$0xff]
    %v2662 = vld [vmem:[%s1 + $0x308] sm:$0xff]
    %v2663 = vld [vmem:[%s1 + $0x310] sm:$0xff]
    %v2664 = vld [vmem:[%s1 + $0x318] sm:$0xff]
    %v2665 = vld [vmem:[%s1 + $0x320] sm:$0xff]
    %v2666 = vld [vmem:[%s1 + $0x328] sm:$0xff]
    %v2667 = vld [vmem:[%s1 + $0x330] sm:$0xff]
    %v2668 = vld [vmem:[%s1 + $0x338] sm:$0xff]
    %v2669 = vld [vmem:[%s1 + $0x340] sm:$0xff]
    %v2670 = vld [vmem:[%s1 + $0x348] sm:$0xff]
    %v2671 = vld [vmem:[%s1 + $0x350] sm:$0xff]
    %v2672 = vld [vmem:[%s1 + $0x358] sm:$0xff]
    %v2673 = vld [vmem:[%s1 + $0x360] sm:$0xff]
    %v2674 = vld [vmem:[%s1 + $0x368] sm:$0xff]
    %v2675 = vld [vmem:[%s1 + $0x370] sm:$0xff]
    %v2676 = vld [vmem:[%s1 + $0x378] sm:$0xff]
    %v2677 = vld [vmem:[%s1 + $0x380] sm:$0xff]
    %v2678 = vld [vmem:[%s1 + $0x388] sm:$0xff]
    %v2679 = vld [vmem:[%s1 + $0x390] sm:$0xff]
    %v2680 = vld [vmem:[%s1 + $0x398] sm:$0xff]
    %v2681 = vld [vmem:[%s1 + $0x3a0] sm:$0xff]
    %v2682 = vld [vmem:[%s1 + $0x3a8] sm:$0xff]
    %v2683 = vld [vmem:[%s1 + $0x3b0] sm:$0xff]
    %v2684 = vld [vmem:[%s1 + $0x3b8] sm:$0xff]
    %v2685 = vld [vmem:[%s1 + $0x3c0] sm:$0xff]
    %v2686 = vld [vmem:[%s1 + $0x3c8] sm:$0xff]
    %v2687 = vld [vmem:[%s1 + $0x3d0] sm:$0xff]
    %v2688 = vld [vmem:[%s1 + $0x3d8] sm:$0xff]
    %v2689 = vld [vmem:[%s1 + $0x3e0] sm:$0xff]
    %v2690 = vld [vmem:[%s1 + $0x3e8] sm:$0xff]
    %v2691 = vld [vmem:[%s1 + $0x3f0] sm:$0xff]
    %v2692 = vld [vmem:[%s1 + $0x3f8] sm:$0xff]
    %v2693 = vld [vmem:[%s1 + $0x400] sm:$0xff]
    %v2694 = vld [vmem:[%s1 + $0x408] sm:$0xff]
    %v2695 = vld [vmem:[%s1 + $0x410] sm:$0xff]
    %v2696 = vld [vmem:[%s1 + $0x418] sm:$0xff]
    %v2697 = vld [vmem:[%s1 + $0x420] sm:$0xff]
    %v2698 = vld [vmem:[%s1 + $0x428] sm:$0xff]
    %v2699 = vld [vmem:[%s1 + $0x430] sm:$0xff]
    %v2700 = vld [vmem:[%s1 + $0x438] sm:$0xff]
    %v2701 = vld [vmem:[%s1 + $0x440] sm:$0xff]
    %v2702 = vld [vmem:[%s1 + $0x448] sm:$0xff]
    %v2703 = vld [vmem:[%s1 + $0x450] sm:$0xff]
    %v2704 = vld [vmem:[%s1 + $0x458] sm:$0xff]
    %v2705 = vld [vmem:[%s2 + $0xe] sm:$0x1]
    %v2706 = vlaneseq
    %v2707 = vshrl.u32 %v2706, 7
    %v2708 = vsub.s32 0, %v2707
    %v2709 = vrot.slane %v2705, %v2708
    %2710 = vmatprep.subr.mxu0 0.0
    %2711 = vmatpush1.msra.mxu0 %v2608
    %2712 = vmatprep.subr.mxu0 0.0
    %2713 = vmatpush1.msra.mxu0 %v2607
    %2714 = vmatprep.subr.mxu0 0.0
    %2715 = vmatpush1.msra.mxu0 %v2606
    %2716 = vmatprep.subr.mxu0 0.0
    %2717 = vmatpush1.msra.mxu0 %v2605
    %2718 = vmatprep.subr.mxu0 0.0
    %2719 = vmatpush1.msra.mxu0 %v2604
    %2720 = vmatprep.subr.mxu0 0.0
    %2721 = vmatpush1.msra.mxu0 %v2603
    %2722 = vmatprep.subr.mxu0 0.0
    %2723 = vmatpush1.msra.mxu0 %v2602
    %2724 = vmatprep.subr.mxu0 0.0
    %2725 = vmatpush1.msra.mxu0 %v2601
    %2726 = vmatprep.subr.mxu0 0.0
    %2727 = vmatpush1.msra.mxu0 %v2600
    %2728 = vmatprep.subr.mxu0 0.0
    %2729 = vmatpush1.msra.mxu0 %v2599
    %2730 = vmatprep.subr.mxu0 0.0
    %2731 = vmatpush1.msra.mxu0 %v2598
    %2732 = vmatprep.subr.mxu0 0.0
    %2733 = vmatpush1.msra.mxu0 %v2597
    %2734 = vmatprep.subr.mxu0 0.0
    %2735 = vmatpush1.msra.mxu0 %v2596
    %2736 = vmatprep.subr.mxu0 0.0
    %2737 = vmatpush1.msra.mxu0 %v2595
    %2738 = vmatprep.subr.mxu0 0.0
    %2739 = vmatpush1.msra.mxu0 %v2594
    %2740 = vmatprep.subr.mxu0 0.0
    %2741 = vmatpush1.msra.mxu0 %v2593
    %2742 = vmatprep.subr.mxu0 0.0
    %2743 = vmatpush2.msra.mxu0 %v2624
    %2744 = vmatprep.subr.mxu0 0.0
    %2745 = vmatpush2.msra.mxu0 %v2623
    %2746 = vmatprep.subr.mxu0 0.0
    %2747 = vmatpush2.msra.mxu0 %v2622
    %2748 = vmatprep.subr.mxu0 0.0
    %2749 = vmatpush2.msra.mxu0 %v2621
    %2750 = vmatprep.subr.mxu0 0.0
    %2751 = vmatpush2.msra.mxu0 %v2620
    %2752 = vmatprep.subr.mxu0 0.0
    %2753 = vmatpush2.msra.mxu0 %v2619
    %2754 = vmatprep.subr.mxu0 0.0
    %2755 = vmatpush2.msra.mxu0 %v2618
    %2756 = vmatprep.subr.mxu0 0.0
    %2757 = vmatpush2.msra.mxu0 %v2617
    %2758 = vmatprep.subr.mxu0 0.0
    %2759 = vmatpush2.msra.mxu0 %v2616
    %2760 = vmatprep.subr.mxu0 0.0
    %2761 = vmatpush2.msra.mxu0 %v2615
    %2762 = vmatprep.subr.mxu0 0.0
    %2763 = vmatpush2.msra.mxu0 %v2614
    %2764 = vmatprep.subr.mxu0 0.0
    %2765 = vmatpush2.msra.mxu0 %v2613
    %2766 = vmatprep.subr.mxu0 0.0
    %2767 = vmatpush2.msra.mxu0 %v2612
    %2768 = vmatprep.subr.mxu0 0.0
    %2769 = vmatpush2.msra.mxu0 %v2611
    %2770 = vmatprep.subr.mxu0 0.0
    %2771 = vmatpush2.msra.mxu0 %v2610
    %2772 = vmatprep.subr.mxu0 0.0
    %2773 = vmatpush2.msra.mxu0 %v2609
    %2774 = vmatprep.mubr.f32.mxu0 %v2571
    %2775 = vmatmul.mubr.f32.gmra.mxu0 %v2568
    %v2776 = vpop.f32.mrf.mxu0
    %v2777 = vadd.f32 %v2709, %v2776
    %v2778 = vpop.f32.mrf.mxu0
    %2779 = vdwg.mxu0
    %2780 = vmatprep.subr.mxu0 0.0
    %2781 = vmatpush1.msra.mxu0 %v2640
    %2782 = vmatprep.subr.mxu0 0.0
    %2783 = vmatpush1.msra.mxu0 %v2639
    %2784 = vmatprep.subr.mxu0 0.0
    %2785 = vmatpush1.msra.mxu0 %v2638
    %2786 = vmatprep.subr.mxu0 0.0
    %2787 = vmatpush1.msra.mxu0 %v2637
    %2788 = vmatprep.subr.mxu0 0.0
    %2789 = vmatpush1.msra.mxu0 %v2636
    %2790 = vmatprep.subr.mxu0 0.0
    %2791 = vmatpush1.msra.mxu0 %v2635
    %2792 = vmatprep.subr.mxu0 0.0
    %2793 = vmatpush1.msra.mxu0 %v2634
    %2794 = vmatprep.subr.mxu0 0.0
    %2795 = vmatpush1.msra.mxu0 %v2633
    %2796 = vmatprep.subr.mxu0 0.0
    %2797 = vmatpush1.msra.mxu0 %v2632
    %2798 = vmatprep.subr.mxu0 0.0
    %2799 = vmatpush1.msra.mxu0 %v2631
    %2800 = vmatprep.subr.mxu0 0.0
    %2801 = vmatpush1.msra.mxu0 %v2630
    %2802 = vmatprep.subr.mxu0 0.0
    %2803 = vmatpush1.msra.mxu0 %v2629
    %2804 = vmatprep.subr.mxu0 0.0
    %2805 = vmatpush1.msra.mxu0 %v2628
    %2806 = vmatprep.subr.mxu0 0.0
    %2807 = vmatpush1.msra.mxu0 %v2627
    %2808 = vmatprep.subr.mxu0 0.0
    %2809 = vmatpush1.msra.mxu0 %v2626
    %2810 = vmatprep.subr.mxu0 0.0
    %2811 = vmatpush1.msra.mxu0 %v2625
    %2812 = vmatprep.subr.mxu0 0.0
    %2813 = vmatpush2.msra.mxu0 %v2656
    %2814 = vmatprep.subr.mxu0 0.0
    %2815 = vmatpush2.msra.mxu0 %v2655
    %2816 = vmatprep.subr.mxu0 0.0
    %2817 = vmatpush2.msra.mxu0 %v2654
    %2818 = vmatprep.subr.mxu0 0.0
    %2819 = vmatpush2.msra.mxu0 %v2653
    %2820 = vmatprep.subr.mxu0 0.0
    %2821 = vmatpush2.msra.mxu0 %v2652
    %2822 = vmatprep.subr.mxu0 0.0
    %2823 = vmatpush2.msra.mxu0 %v2651
    %2824 = vmatprep.subr.mxu0 0.0
    %2825 = vmatpush2.msra.mxu0 %v2650
    %2826 = vmatprep.subr.mxu0 0.0
    %2827 = vmatpush2.msra.mxu0 %v2649
    %2828 = vmatprep.subr.mxu0 0.0
    %2829 = vmatpush2.msra.mxu0 %v2648
    %2830 = vmatprep.subr.mxu0 0.0
    %2831 = vmatpush2.msra.mxu0 %v2647
    %2832 = vmatprep.subr.mxu0 0.0
    %2833 = vmatpush2.msra.mxu0 %v2646
    %2834 = vmatprep.subr.mxu0 0.0
    %2835 = vmatpush2.msra.mxu0 %v2645
    %2836 = vmatprep.subr.mxu0 0.0
    %2837 = vmatpush2.msra.mxu0 %v2644
    %2838 = vmatprep.subr.mxu0 0.0
    %2839 = vmatpush2.msra.mxu0 %v2643
    %2840 = vmatprep.subr.mxu0 0.0
    %2841 = vmatpush2.msra.mxu0 %v2642
    %2842 = vmatprep.subr.mxu0 0.0
    %2843 = vmatpush2.msra.mxu0 %v2641
    %2844 = vmatprep.mubr.f32.mxu0 %v2579
    %2845 = vmatmul.mubr.f32.gmra.mxu0 %v2575
    %v2846 = vpop.f32.mrf.mxu0
    %v2847 = vadd.f32 %v2777, %v2846
    %v2848 = vpop.f32.mrf.mxu0
    %2849 = vdwg.mxu0
    %2850 = vmatprep.subr.mxu0 0.0
    %2851 = vmatpush1.msra.mxu0 %v2672
    %2852 = vmatprep.subr.mxu0 0.0
    %2853 = vmatpush1.msra.mxu0 %v2671
    %2854 = vmatprep.subr.mxu0 0.0
    %2855 = vmatpush1.msra.mxu0 %v2670
    %2856 = vmatprep.subr.mxu0 0.0
    %2857 = vmatpush1.msra.mxu0 %v2669
    %2858 = vmatprep.subr.mxu0 0.0
    %2859 = vmatpush1.msra.mxu0 %v2668
    %2860 = vmatprep.subr.mxu0 0.0
    %2861 = vmatpush1.msra.mxu0 %v2667
    %2862 = vmatprep.subr.mxu0 0.0
    %2863 = vmatpush1.msra.mxu0 %v2666
    %2864 = vmatprep.subr.mxu0 0.0
    %2865 = vmatpush1.msra.mxu0 %v2665
    %2866 = vmatprep.subr.mxu0 0.0
    %2867 = vmatpush1.msra.mxu0 %v2664
    %2868 = vmatprep.subr.mxu0 0.0
    %2869 = vmatpush1.msra.mxu0 %v2663
    %2870 = vmatprep.subr.mxu0 0.0
    %2871 = vmatpush1.msra.mxu0 %v2662
    %2872 = vmatprep.subr.mxu0 0.0
    %2873 = vmatpush1.msra.mxu0 %v2661
    %2874 = vmatprep.subr.mxu0 0.0
    %2875 = vmatpush1.msra.mxu0 %v2660
    %2876 = vmatprep.subr.mxu0 0.0
    %2877 = vmatpush1.msra.mxu0 %v2659
    %2878 = vmatprep.subr.mxu0 0.0
    %2879 = vmatpush1.msra.mxu0 %v2658
    %2880 = vmatprep.subr.mxu0 0.0
    %2881 = vmatpush1.msra.mxu0 %v2657
    %2882 = vmatprep.subr.mxu0 0.0
    %2883 = vmatpush2.msra.mxu0 %v2688
    %2884 = vmatprep.subr.mxu0 0.0
    %2885 = vmatpush2.msra.mxu0 %v2687
    %2886 = vmatprep.subr.mxu0 0.0
    %2887 = vmatpush2.msra.mxu0 %v2686
    %2888 = vmatprep.subr.mxu0 0.0
    %2889 = vmatpush2.msra.mxu0 %v2685
    %2890 = vmatprep.subr.mxu0 0.0
    %2891 = vmatpush2.msra.mxu0 %v2684
    %2892 = vmatprep.subr.mxu0 0.0
    %2893 = vmatpush2.msra.mxu0 %v2683
    %2894 = vmatprep.subr.mxu0 0.0
    %2895 = vmatpush2.msra.mxu0 %v2682
    %2896 = vmatprep.subr.mxu0 0.0
    %2897 = vmatpush2.msra.mxu0 %v2681
    %2898 = vmatprep.subr.mxu0 0.0
    %2899 = vmatpush2.msra.mxu0 %v2680
    %2900 = vmatprep.subr.mxu0 0.0
    %2901 = vmatpush2.msra.mxu0 %v2679
    %2902 = vmatprep.subr.mxu0 0.0
    %2903 = vmatpush2.msra.mxu0 %v2678
    %2904 = vmatprep.subr.mxu0 0.0
    %2905 = vmatpush2.msra.mxu0 %v2677
    %2906 = vmatprep.subr.mxu0 0.0
    %2907 = vmatpush2.msra.mxu0 %v2676
    %2908 = vmatprep.subr.mxu0 0.0
    %2909 = vmatpush2.msra.mxu0 %v2675
    %2910 = vmatprep.subr.mxu0 0.0
    %2911 = vmatpush2.msra.mxu0 %v2674
    %2912 = vmatprep.subr.mxu0 0.0
    %2913 = vmatpush2.msra.mxu0 %v2673
    %2914 = vmatprep.mubr.f32.mxu0 %v2587
    %2915 = vmatmul.mubr.f32.gmra.mxu0 %v2583
    %v2916 = vpop.f32.mrf.mxu0
    %v2917 = vadd.f32 %v2847, %v2916
    %v2918 = vpop.f32.mrf.mxu0
    %2919 = vdwg.mxu0
    %2920 = vmatprep.subr.mxu0 0.0
    %2921 = vmatpush1.msra.mxu0 %v2704
    %2922 = vmatprep.subr.mxu0 0.0
    %2923 = vmatpush1.msra.mxu0 %v2703
    %2924 = vmatprep.subr.mxu0 0.0
    %2925 = vmatpush1.msra.mxu0 %v2702
    %2926 = vmatprep.subr.mxu0 0.0
    %2927 = vmatpush1.msra.mxu0 %v2701
    %2928 = vmatprep.subr.mxu0 0.0
    %2929 = vmatpush1.msra.mxu0 %v2700
    %2930 = vmatprep.subr.mxu0 0.0
    %2931 = vmatpush1.msra.mxu0 %v2699
    %2932 = vmatprep.subr.mxu0 0.0
    %2933 = vmatpush1.msra.mxu0 %v2698
    %2934 = vmatprep.subr.mxu0 0.0
    %2935 = vmatpush1.msra.mxu0 %v2697
    %2936 = vmatprep.subr.mxu0 0.0
    %2937 = vmatpush1.msra.mxu0 %v2696
    %2938 = vmatprep.subr.mxu0 0.0
    %2939 = vmatpush1.msra.mxu0 %v2695
    %2940 = vmatprep.subr.mxu0 0.0
    %2941 = vmatpush1.msra.mxu0 %v2694
    %2942 = vmatprep.subr.mxu0 0.0
    %2943 = vmatpush1.msra.mxu0 %v2693
    %2944 = vmatprep.subr.mxu0 0.0
    %2945 = vmatpush1.msra.mxu0 %v2692
    %2946 = vmatprep.subr.mxu0 0.0
    %2947 = vmatpush1.msra.mxu0 %v2691
    %2948 = vmatprep.subr.mxu0 0.0
    %2949 = vmatpush1.msra.mxu0 %v2690
    %2950 = vmatprep.subr.mxu0 0.0
    %2951 = vmatpush1.msra.mxu0 %v2689
    %2952 = vmatprep.subr.mxu0 0.0
    %2953 = vmatpush2.msra.mxu0 0.0
    %2954 = vmatprep.subr.mxu0 0.0
    %2955 = vmatpush2.msra.mxu0 0.0
    %2956 = vmatprep.subr.mxu0 0.0
    %2957 = vmatpush2.msra.mxu0 0.0
    %2958 = vmatprep.subr.mxu0 0.0
    %2959 = vmatpush2.msra.mxu0 0.0
    %2960 = vmatprep.subr.mxu0 0.0
    %2961 = vmatpush2.msra.mxu0 0.0
    %2962 = vmatprep.subr.mxu0 0.0
    %2963 = vmatpush2.msra.mxu0 0.0
    %2964 = vmatprep.subr.mxu0 0.0
    %2965 = vmatpush2.msra.mxu0 0.0
    %2966 = vmatprep.subr.mxu0 0.0
    %2967 = vmatpush2.msra.mxu0 0.0
    %2968 = vmatprep.subr.mxu0 0.0
    %2969 = vmatpush2.msra.mxu0 0.0
    %2970 = vmatprep.subr.mxu0 0.0
    %2971 = vmatpush2.msra.mxu0 0.0
    %2972 = vmatprep.subr.mxu0 0.0
    %2973 = vmatpush2.msra.mxu0 0.0
    %2974 = vmatprep.subr.mxu0 0.0
    %2975 = vmatpush2.msra.mxu0 0.0
    %2976 = vmatprep.subr.mxu0 0.0
    %2977 = vmatpush2.msra.mxu0 0.0
    %2978 = vmatprep.subr.mxu0 0.0
    %2979 = vmatpush2.msra.mxu0 0.0
    %2980 = vmatprep.subr.mxu0 0.0
    %2981 = vmatpush2.msra.mxu0 0.0
    %2982 = vmatprep.subr.mxu0 0.0
    %2983 = vmatpush2.msra.mxu0 0.0
    %2984 = vmatprep.mubr.f32.mxu0 0.0
    %2985 = vmatmul.mubr.f32.gmra.mxu0 %v2591
    %v2986 = vpop.f32.mrf.mxu0
    %v2987 = vadd.f32 %v2917, %v2986
    %v2988 = vpop.f32.mrf.mxu0
    %2989 = vdwg.mxu0
    %v2990 = vld [vmem:[%s2 + $0xf] sm:$0x1]
    %v2991 = vld [vmem:[%s2 + $0x10] sm:$0x1]
    %vm2992 = vcmask 1041408
    %v2993 = vsel %vm2992, %v2987, 0.0
    %v2994 = vrot.slane %v2993, 4
    %v2995 = vadd.f32 %v2993, %v2994
    %v2996 = vrot.slane %v2995, 2
    %v2997 = vadd.f32 %v2995, %v2996
    %v2998 = vrot.slane %v2997, 1
    %v2999 = vadd.f32 %v2997, %v2998
    %v3000 = vrcp.pop 2.0
    %v3001 = vmul.f32 %v2999, %v3000
    %v3002 = vmul.f32 %v2987, %v2987
    %v3003 = vsel %vm2992, %v3002, 0.0
    %v3004 = vrot.slane %v3003, 4
    %v3005 = vadd.f32 %v3003, %v3004
    %v3006 = vrot.slane %v3005, 2
    %v3007 = vadd.f32 %v3005, %v3006
    %v3008 = vrot.slane %v3007, 1
    %v3009 = vadd.f32 %v3007, %v3008
    %v3010 = vmul.f32 %v3009, %v3000
    %v3011 = vmul.f32 %v3001, %v3001
    %v3012 = vsub.f32 %v3010, %v3011
    %v3013 = vsub.f32 %v2987, %v3001
    %v3014 = vlaneseq
    %v3015 = vshrl.u32 %v3014, 7
    %v3016 = vsub.s32 0, %v3015
    %v3017 = vrot.slane %v2990, %v3016
    %v3018 = vmul.f32 %v3017, %v3013
    %v3019 = vadd.f32 %v3012, 1e-05
    %v3020 = vrsqrt.pop %v3019
    %v3021 = vmul.f32 %v3018, %v3020
    %v3022 = vlaneseq
    %v3023 = vshrl.u32 %v3022, 7
    %v3024 = vsub.s32 0, %v3023
    %v3025 = vrot.slane %v2991, %v3024
    %v3026 = vadd.f32 %v3021, %v3025
    %v3027 = vmax.f32 %v3026, 0.0
    %v3028 = vld [vmem:[%s1 + $0x460] sm:$0xff]
    %v3029 = vld [vmem:[%s1 + $0x468] sm:$0xff]
    %v3030 = vld [vmem:[%s1 + $0x470] sm:$0xff]
    %v3031 = vld [vmem:[%s1 + $0x478] sm:$0xff]
    %v3032 = vld [vmem:[%s1 + $0x480] sm:$0xff]
    %v3033 = vld [vmem:[%s1 + $0x488] sm:$0xff]
    %v3034 = vld [vmem:[%s1 + $0x490] sm:$0xff]
    %v3035 = vld [vmem:[%s1 + $0x498] sm:$0xff]
    %v3036 = vld [vmem:[%s1 + $0x4a0] sm:$0xff]
    %v3037 = vld [vmem:[%s1 + $0x4a8] sm:$0xff]
    %v3038 = vld [vmem:[%s1 + $0x4b0] sm:$0xff]
    %v3039 = vld [vmem:[%s1 + $0x4b8] sm:$0xff]
    %v3040 = vld [vmem:[%s1 + $0x4c0] sm:$0xff]
    %v3041 = vld [vmem:[%s1 + $0x4c8] sm:$0xff]
    %v3042 = vld [vmem:[%s1 + $0x4d0] sm:$0xff]
    %v3043 = vld [vmem:[%s1 + $0x4d8] sm:$0xff]
    %v3044 = vld [vmem:[%s2 + $0x11] sm:$0x1]
    %v3045 = vlaneseq
    %v3046 = vshrl.u32 %v3045, 7
    %v3047 = vsub.s32 0, %v3046
    %v3048 = vrot.slane %v3044, %v3047
    %3049 = vmatprep.subr.mxu0 0.0
    %3050 = vmatpush1.msra.mxu0 %v3043
    %3051 = vmatprep.subr.mxu0 0.0
    %3052 = vmatpush1.msra.mxu0 %v3042
    %3053 = vmatprep.subr.mxu0 0.0
    %3054 = vmatpush1.msra.mxu0 %v3041
    %3055 = vmatprep.subr.mxu0 0.0
    %3056 = vmatpush1.msra.mxu0 %v3040
    %3057 = vmatprep.subr.mxu0 0.0
    %3058 = vmatpush1.msra.mxu0 %v3039
    %3059 = vmatprep.subr.mxu0 0.0
    %3060 = vmatpush1.msra.mxu0 %v3038
    %3061 = vmatprep.subr.mxu0 0.0
    %3062 = vmatpush1.msra.mxu0 %v3037
    %3063 = vmatprep.subr.mxu0 0.0
    %3064 = vmatpush1.msra.mxu0 %v3036
    %3065 = vmatprep.subr.mxu0 0.0
    %3066 = vmatpush1.msra.mxu0 %v3035
    %3067 = vmatprep.subr.mxu0 0.0
    %3068 = vmatpush1.msra.mxu0 %v3034
    %3069 = vmatprep.subr.mxu0 0.0
    %3070 = vmatpush1.msra.mxu0 %v3033
    %3071 = vmatprep.subr.mxu0 0.0
    %3072 = vmatpush1.msra.mxu0 %v3032
    %3073 = vmatprep.subr.mxu0 0.0
    %3074 = vmatpush1.msra.mxu0 %v3031
    %3075 = vmatprep.subr.mxu0 0.0
    %3076 = vmatpush1.msra.mxu0 %v3030
    %3077 = vmatprep.subr.mxu0 0.0
    %3078 = vmatpush1.msra.mxu0 %v3029
    %3079 = vmatprep.subr.mxu0 0.0
    %3080 = vmatpush1.msra.mxu0 %v3028
    %3081 = vmatprep.subr.mxu0 0.0
    %3082 = vmatpush2.msra.mxu0 0.0
    %3083 = vmatprep.subr.mxu0 0.0
    %3084 = vmatpush2.msra.mxu0 0.0
    %3085 = vmatprep.subr.mxu0 0.0
    %3086 = vmatpush2.msra.mxu0 0.0
    %3087 = vmatprep.subr.mxu0 0.0
    %3088 = vmatpush2.msra.mxu0 0.0
    %3089 = vmatprep.subr.mxu0 0.0
    %3090 = vmatpush2.msra.mxu0 0.0
    %3091 = vmatprep.subr.mxu0 0.0
    %3092 = vmatpush2.msra.mxu0 0.0
    %3093 = vmatprep.subr.mxu0 0.0
    %3094 = vmatpush2.msra.mxu0 0.0
    %3095 = vmatprep.subr.mxu0 0.0
    %3096 = vmatpush2.msra.mxu0 0.0
    %3097 = vmatprep.subr.mxu0 0.0
    %3098 = vmatpush2.msra.mxu0 0.0
    %3099 = vmatprep.subr.mxu0 0.0
    %3100 = vmatpush2.msra.mxu0 0.0
    %3101 = vmatprep.subr.mxu0 0.0
    %3102 = vmatpush2.msra.mxu0 0.0
    %3103 = vmatprep.subr.mxu0 0.0
    %3104 = vmatpush2.msra.mxu0 0.0
    %3105 = vmatprep.subr.mxu0 0.0
    %3106 = vmatpush2.msra.mxu0 0.0
    %3107 = vmatprep.subr.mxu0 0.0
    %3108 = vmatpush2.msra.mxu0 0.0
    %3109 = vmatprep.subr.mxu0 0.0
    %3110 = vmatpush2.msra.mxu0 0.0
    %3111 = vmatprep.subr.mxu0 0.0
    %3112 = vmatpush2.msra.mxu0 0.0
    %3113 = vmatprep.mubr.f32.mxu0 0.0
    %3114 = vmatmul.mubr.f32.gmra.mxu0 %v3027
    %v3115 = vpop.f32.mrf.mxu0
    %v3116 = vadd.f32 %v3048, %v3115
    %v3117 = vpop.f32.mrf.mxu0
    %3118 = vdwg.mxu0
    %3119 = vst [vmem:[#allocation2] sm:$0x3] %v3116
    // Predicated region
    $region14: #{cnn1d_batchnorm_forward.1} parent=1 // pred_check
      _
    $region15: #{cnn1d_batchnorm_forward.1} parent=1 // pred_check_branch
      %3121 = sbr.rel (0) target = $region17
    $region16: #{cnn1d_batchnorm_forward.1} parent=1 // pred_region
      %s3123 = ssub.s32 32, 32
      %3124 = vsyncadd [#allocation3], %s3123
      %s3126 = sshll.u32 [#allocation2], 4
      %s3127 = int_to_ptr.vmem [resolvable:$true] %s3126
      %3129 = dma.vmem_to_hbm [thread:$0]  %s3127, 32, %s3, [#allocation3]
    $region17: #{cnn1d_batchnorm_forward.1} parent=1 // pred_fallthru
      _
    // Predicated region
    $region18: #{cnn1d_batchnorm_forward.1} parent=1 // pred_check
      _
    $region19: #{cnn1d_batchnorm_forward.1} parent=1 // pred_check_branch
      %3131 = sbr.rel (0) target = $region21
    $region20: #{cnn1d_batchnorm_forward.1} parent=1 // pred_region
      %3132 = dma.done [#allocation3], 32
    $region21: #{cnn1d_batchnorm_forward.1} parent=1 // pred_fallthru
      _
    %3133 = vsyncpa [#allocation3], 1

</llo_original>
